<compile_context>
chip_gen: v7x
topology: tpu7x:2x2x1
jax: 0.10.0
libtpu: 0.0.40
codegen_flags: <defaults>
</compile_context>

<pallas_src>
import numpy as np
import jax
import jax.numpy as jnp
from jax.experimental import pallas as pl
from jax.experimental.pallas import tpu as pltpu


# ----------------------------------------------------------------------------
# Feature-map coords -> original-image coords (pure JAX, used by the reference).
# ----------------------------------------------------------------------------
def coords_fmap2orig_jax(h, w, stride):
    shifts_x = jnp.arange(0, w * stride, stride, dtype=jnp.float32)
    shifts_y = jnp.arange(0, h * stride, stride, dtype=jnp.float32)
    shift_y, shift_x = jnp.meshgrid(shifts_y, shifts_x, indexing="ij")
    coords = jnp.stack([shift_x.reshape(-1), shift_y.reshape(-1)], axis=-1)
    return coords + (stride // 2)  # [h*w, 2] float32


# ----------------------------------------------------------------------------
# Pallas kernel: one sublane-packed HW tile (all levels fused), B and M
# unrolled, gt data read as SMEM scalars.
#   meta_ref : [4, S, L] f32 VMEM   rows = (cx, cy, level_lo, level_hi)
#   x0..y1   : [B, M]   f32 SMEM   gt box corners
#   cls_ref  : [B, M]   i32 SMEM   gt classes
#   out_ref  : [B, S, L] i32 VMEM  class targets for this tile
# ----------------------------------------------------------------------------
def _gen_targets_kernel(meta_ref, x0_ref, y0_ref, x1_ref, y1_ref, cls_ref,
                        out_ref):
    cx = meta_ref[0]          # [S, L] full-slab values -> fully packed vregs
    cy = meta_ref[1]
    lo = meta_ref[2]
    hi = meta_ref[3]

    B, S, L = out_ref.shape
    M = cls_ref.shape[1]
    BIG = jnp.float32(99999999.0)   # same sentinel as the PyTorch reference

    for b in range(B):
        # Running accumulators over the packed [S, L] slab for this batch elem.
        min_area = jnp.full((S, L), BIG, dtype=jnp.float32)
        best_cls = jnp.zeros((S, L), dtype=jnp.int32)
        any_pos = jnp.zeros((S, L), dtype=jnp.bool_)

        # M is small and static -> static unroll with SMEM scalar reads.
        # TODO(synk): for large M (>~16) switch to lax.fori_loop(unroll=4..8)
        # over pl.ds(m, 1) reads to keep live ranges under 64 vregs.
        for m in range(M):
            x0 = x0_ref[b, m]            # scalar f32 (SMEM -> sreg splat)
            y0 = y0_ref[b, m]
            x1 = x1_ref[b, m]
            y1 = y1_ref[b, m]
            c = cls_ref[b, m]            # scalar i32

            l_off = cx - x0              # [S, L] lane/sublane-dense VPU work
            t_off = cy - y0
            r_off = x1 - cx
            b_off = y1 - cy

            off_min = jnp.minimum(jnp.minimum(l_off, t_off),
                                  jnp.minimum(r_off, b_off))
            off_max = jnp.maximum(jnp.maximum(l_off, t_off),
                                  jnp.maximum(r_off, b_off))
            area = (x1 - x0) * (y1 - y0)     # per-(b,m) scalar, not vector work

            pos = (off_min > 0.0) & (off_max > lo) & (off_max <= hi)
            # Strict '<' keeps the first minimal index (torch argmin semantics);
            # BIG sentinel is folded into the init value of min_area.
            better = pos & (area < min_area)
            min_area = jnp.where(better, area, min_area)
            best_cls = jnp.where(better, c, best_cls)
            any_pos = jnp.logical_or(any_pos, pos)

        out_ref[b] = jnp.where(any_pos, best_cls, jnp.int32(0))


# ----------------------------------------------------------------------------
# Wrapper: fuse all pyramid levels into one pallas_call over packed HW tiles.
# ----------------------------------------------------------------------------
class GenTargetsPallas:
    def __init__(self, strides, limit_range, tile_lanes=512, tile_sublanes=8):
        assert len(strides) == len(limit_range)
        self.strides = list(strides)
        self.limit_range = [list(lr) for lr in limit_range]
        # Lane tile must be a multiple of 128, sublane tile a multiple of 8.
        self.tile_lanes = max(128, ((int(tile_lanes) + 127) // 128) * 128)
        self.tile_sublanes = max(8, ((int(tile_sublanes) + 7) // 8) * 8)
        # meta depends only on static feature-map shapes -> cache per shapes.
        self._meta_cache = {}

    # Build (and cache) the [4, R_pad, L] per-location side data on the host.
    def _get_meta(self, shapes):
        key = tuple(shapes)
        hit = self._meta_cache.get(key)
        if hit is not None:
            return hit

        L = self.tile_lanes
        S = self.tile_sublanes
        tile = S * L

        cx_l, cy_l, lo_l, hi_l = [], [], [], []
        hw_total = 0
        for (h, w), stride, lr in zip(shapes, self.strides, self.limit_range):
            half = np.float32(stride // 2)
            sx = np.arange(0, w * stride, stride, dtype=np.float32) + half
            sy = np.arange(0, h * stride, stride, dtype=np.float32) + half
            yy, xx = np.meshgrid(sy, sx, indexing="ij")
            cx_l.append(xx.reshape(-1))
            cy_l.append(yy.reshape(-1))
            lo_l.append(np.full(h * w, float(lr[0]), np.float32))
            hi_l.append(np.full(h * w, float(lr[1]), np.float32))
            hw_total += h * w

        hw_pad = ((hw_total + tile - 1) // tile) * tile
        pad = hw_pad - hw_total
        cx = np.pad(np.concatenate(cx_l), (0, pad))
        cy = np.pad(np.concatenate(cy_l), (0, pad))
        # pad positions can never be positive -> output 0 (sliced off anyway)
        lo = np.pad(np.concatenate(lo_l), (0, pad), constant_values=np.inf)
        hi = np.pad(np.concatenate(hi_l), (0, pad), constant_values=-np.inf)

        meta = np.stack([cx, cy, lo, hi], axis=0).reshape(4, hw_pad // L, L)
        result = (jnp.asarray(meta), hw_total, hw_pad)
        self._meta_cache[key] = result
        return result

    def __call__(self, srcs, gt_boxes, batch_classes):
        # srcs: list of [B, C, h, w] (NCHW, PyTorch convention); only shapes used.
        assert len(self.strides) == len(srcs)
        B, M = int(gt_boxes.shape[0]), int(gt_boxes.shape[1])
        shapes = tuple((int(f.shape[2]), int(f.shape[3])) for f in srcs)
        meta, hw_total, hw_pad = self._get_meta(shapes)

        L = self.tile_lanes
        S = self.tile_sublanes
        n_tiles = hw_pad // (S * L)      # keep >= 2 at real sizes for v7x
        r_pad = hw_pad // L

        # gt data sliced / cast once; placed in SMEM (scalar reads in-kernel).
        x0 = gt_boxes[..., 0]
        y0 = gt_boxes[..., 1]
        x1 = gt_boxes[..., 2]
        y1 = gt_boxes[..., 3]
        cls_i32 = batch_classes.astype(jnp.int32)

        smem_spec = pl.BlockSpec(memory_space=pltpu.MemorySpace.SMEM)
        out = pl.pallas_call(
            _gen_targets_kernel,
            out_shape=jax.ShapeDtypeStruct((B, r_pad, L), jnp.int32),
            grid=(n_tiles,),
            in_specs=[
                pl.BlockSpec((4, S, L), lambda i: (0, i, 0)),   # cx/cy/lo/hi
                smem_spec,                                      # x0
                smem_spec,                                      # y0
                smem_spec,                                      # x1
                smem_spec,                                      # y1
                smem_spec,                                      # classes
            ],
            out_specs=pl.BlockSpec((B, S, L), lambda i: (0, i, 0)),
            compiler_params=pltpu.CompilerParams(
                dimension_semantics=("parallel",)),
        )(meta, x0, y0, x1, y1, cls_i32)

        return out.reshape(B, hw_pad)[:, :hw_total].reshape(B, hw_total, 1)


# ----------------------------------------------------------------------------
# Pure-JAX reference (mirrors the PyTorch math) for correctness checking.
# ----------------------------------------------------------------------------
def _ref_gen_targets(srcs, gt_boxes, classes, strides, limit_ranges):
    outs = []
    for feat, stride, lr in zip(srcs, strides, limit_ranges):
        h, w = feat.shape[2], feat.shape[3]
        coords = coords_fmap2orig_jax(h, w, stride)
        x = coords[:, 0]
        y = coords[:, 1]
        l = x[None, :, None] - gt_boxes[..., 0][:, None, :]
        t = y[None, :, None] - gt_boxes[..., 1][:, None, :]
        r = gt_boxes[..., 2][:, None, :] - x[None, :, None]
        b = gt_boxes[..., 3][:, None, :] - y[None, :, None]
        ltrb = jnp.stack([l, t, r, b], -1)
        areas = (l + r) * (t + b)
        off_min = ltrb.min(-1)
        off_max = ltrb.max(-1)
        mask_pos = (off_min > 0) & (off_max > lr[0]) & (off_max <= lr[1])
        areas = jnp.where(mask_pos, areas, 99999999.0)
        idx = jnp.argmin(areas, axis=-1)
        cls_t = jnp.take_along_axis(classes, idx, axis=1)
        mask2 = mask_pos.sum(-1) >= 1
        outs.append(jnp.where(mask2, cls_t, 0))
    B = gt_boxes.shape[0]
    return jnp.concatenate(outs, axis=1).reshape(B, -1, 1)


if __name__ == "__main__":
    key = jax.random.PRNGKey(0)
    k1, k2, k3, k4, k5, k6 = jax.random.split(key, 6)

    B, C, M = 2, 4, 8
    strides = [4, 8, 16]
    limit_range = [[-1, 32], [32, 64], [64, 99999999]]
    # feature maps for a 128x128 image: 32x32 / 16x16 / 8x8
    srcs = [
        jax.random.normal(k1, (B, C, 32, 32), dtype=jnp.float32),
        jax.random.normal(k2, (B, C, 16, 16), dtype=jnp.float32),
        jax.random.normal(k6, (B, C, 8, 8), dtype=jnp.float32),
    ]
    # Integer-valued box corners keep all area math exact -> bit-identical
    # argmin / tie-breaking between kernel and reference.
    xy = jnp.round(jax.random.uniform(k3, (B, M, 2), minval=4.0, maxval=90.0))
    wh = jnp.round(jax.random.uniform(k4, (B, M, 2), minval=8.0, maxval=48.0))
    gt_boxes = jnp.concatenate([xy, xy + wh], axis=-1).astype(jnp.float32)  # [B,M,4]
    classes = jax.random.randint(k5, (B, M), 1, C + 1).astype(jnp.int32)    # [B,M]

    # Small tile so the demo exercises a multi-step grid (2 tiles incl. a tile
    # straddling a level boundary and a padded tail).  Default is 8x512=4096.
    gen = GenTargetsPallas(strides, limit_range, tile_lanes=128, tile_sublanes=8)
    out = gen(srcs, gt_boxes, classes)
    out = jax.block_until_ready(out)

    ref = _ref_gen_targets(srcs, gt_boxes, classes, strides, limit_range)
    total_hw = sum(f.shape[2] * f.shape[3] for f in srcs)
    assert out.shape == (B, total_hw, 1), out.shape
    assert out.dtype == jnp.int32
    assert bool(jnp.array_equal(out, ref.astype(jnp.int32))), "mismatch vs reference"

    print("KERNEL_OK")
</pallas_src>

<mosaic_0001>
module attributes {stable_mosaic.version = 11 : i64} {
  func.func @_gen_targets_kernel(%arg0: i32, %arg1: memref<4x8x128xf32, #tpu.memory_space<vmem>>, %arg2: memref<2x8xf32, #tpu.memory_space<smem>>, %arg3: memref<2x8xf32, #tpu.memory_space<smem>>, %arg4: memref<2x8xf32, #tpu.memory_space<smem>>, %arg5: memref<2x8xf32, #tpu.memory_space<smem>>, %arg6: memref<2x8xi32, #tpu.memory_space<smem>>, %arg7: memref<2x8x128xi32, #tpu.memory_space<vmem>>) attributes {dimension_semantics = [#tpu.dimension_semantics<parallel>], iteration_bounds = array<i64: 2>, scalar_prefetch = 0 : i64, scratch_operands = 0 : i64, tpu.core_type = #tpu.core_type<tc>, window_params = [{transform_indices = @transform_0, window_bounds = array<i64: 4, 8, 128>}, {transform_indices = @transform_1, window_bounds = array<i64: 2, 8>}, {transform_indices = @transform_2, window_bounds = array<i64: 2, 8>}, {transform_indices = @transform_3, window_bounds = array<i64: 2, 8>}, {transform_indices = @transform_4, window_bounds = array<i64: 2, 8>}, {transform_indices = @transform_5, window_bounds = array<i64: 2, 8>}, {transform_indices = @transform_6, window_bounds = array<i64: 2, 8, 128>}]} {
    %c0 = arith.constant 0 : index
    %c0_0 = arith.constant 0 : index
    %c0_1 = arith.constant 0 : index
    %0 = vector.load %arg1[%c0, %c0_0, %c0_1] : memref<4x8x128xf32, #tpu.memory_space<vmem>>, vector<1x8x128xf32>
    %1 = vector.shape_cast %0 : vector<1x8x128xf32> to vector<8x128xf32>
    %c1 = arith.constant 1 : index
    %c0_2 = arith.constant 0 : index
    %c0_3 = arith.constant 0 : index
    %2 = vector.load %arg1[%c1, %c0_2, %c0_3] : memref<4x8x128xf32, #tpu.memory_space<vmem>>, vector<1x8x128xf32>
    %3 = vector.shape_cast %2 : vector<1x8x128xf32> to vector<8x128xf32>
    %c2 = arith.constant 2 : index
    %c0_4 = arith.constant 0 : index
    %c0_5 = arith.constant 0 : index
    %4 = vector.load %arg1[%c2, %c0_4, %c0_5] : memref<4x8x128xf32, #tpu.memory_space<vmem>>, vector<1x8x128xf32>
    %5 = vector.shape_cast %4 : vector<1x8x128xf32> to vector<8x128xf32>
    %c3 = arith.constant 3 : index
    %c0_6 = arith.constant 0 : index
    %c0_7 = arith.constant 0 : index
    %6 = vector.load %arg1[%c3, %c0_6, %c0_7] : memref<4x8x128xf32, #tpu.memory_space<vmem>>, vector<1x8x128xf32>
    %7 = vector.shape_cast %6 : vector<1x8x128xf32> to vector<8x128xf32>
    %cst = arith.constant 1.000000e+08 : f32
    %8 = vector.broadcast %cst : f32 to vector<8x128xf32>
    %c0_i32 = arith.constant 0 : i32
    %9 = vector.broadcast %c0_i32 : i32 to vector<8x128xi32>
    %false = arith.constant false
    %10 = vector.broadcast %false : i1 to vector<8x128xi1>
    %c0_8 = arith.constant 0 : index
    %c0_9 = arith.constant 0 : index
    %11 = memref.load %arg2[%c0_8, %c0_9] : memref<2x8xf32, #tpu.memory_space<smem>>
    %c0_10 = arith.constant 0 : index
    %c0_11 = arith.constant 0 : index
    %12 = memref.load %arg3[%c0_10, %c0_11] : memref<2x8xf32, #tpu.memory_space<smem>>
    %c0_12 = arith.constant 0 : index
    %c0_13 = arith.constant 0 : index
    %13 = memref.load %arg4[%c0_12, %c0_13] : memref<2x8xf32, #tpu.memory_space<smem>>
    %c0_14 = arith.constant 0 : index
    %c0_15 = arith.constant 0 : index
    %14 = memref.load %arg5[%c0_14, %c0_15] : memref<2x8xf32, #tpu.memory_space<smem>>
    %c0_16 = arith.constant 0 : index
    %c0_17 = arith.constant 0 : index
    %15 = memref.load %arg6[%c0_16, %c0_17] : memref<2x8xi32, #tpu.memory_space<smem>>
    %16 = vector.broadcast %11 : f32 to vector<8x128xf32>
    %17 = arith.subf %1, %16 : vector<8x128xf32>
    %18 = vector.broadcast %12 : f32 to vector<8x128xf32>
    %19 = arith.subf %3, %18 : vector<8x128xf32>
    %20 = vector.broadcast %13 : f32 to vector<8x128xf32>
    %21 = arith.subf %20, %1 : vector<8x128xf32>
    %22 = vector.broadcast %14 : f32 to vector<8x128xf32>
    %23 = arith.subf %22, %3 : vector<8x128xf32>
    %24 = arith.minimumf %17, %19 : vector<8x128xf32>
    %25 = arith.minimumf %21, %23 : vector<8x128xf32>
    %26 = arith.minimumf %24, %25 : vector<8x128xf32>
    %27 = arith.maximumf %17, %19 : vector<8x128xf32>
    %28 = arith.maximumf %21, %23 : vector<8x128xf32>
    %29 = arith.maximumf %27, %28 : vector<8x128xf32>
    %30 = arith.subf %13, %11 : f32
    %31 = arith.subf %14, %12 : f32
    %32 = arith.mulf %30, %31 : f32
    %cst_18 = arith.constant 0.000000e+00 : f32
    %33 = vector.broadcast %cst_18 : f32 to vector<8x128xf32>
    %34 = arith.cmpf ogt, %26, %33 : vector<8x128xf32>
    %35 = arith.cmpf ogt, %29, %5 : vector<8x128xf32>
    %36 = arith.andi %34, %35 : vector<8x128xi1>
    %37 = arith.cmpf ole, %29, %7 : vector<8x128xf32>
    %38 = arith.andi %36, %37 : vector<8x128xi1>
    %39 = vector.broadcast %32 : f32 to vector<8x128xf32>
    %40 = arith.cmpf olt, %39, %8 : vector<8x128xf32>
    %41 = arith.andi %38, %40 : vector<8x128xi1>
    %42 = vector.broadcast %32 : f32 to vector<8x128xf32>
    %43 = arith.select %41, %42, %8 : vector<8x128xi1>, vector<8x128xf32>
    %44 = vector.broadcast %15 : i32 to vector<8x128xi32>
    %45 = arith.select %41, %44, %9 : vector<8x128xi1>, vector<8x128xi32>
    %46 = arith.ori %10, %38 : vector<8x128xi1>
    %c0_19 = arith.constant 0 : index
    %c1_20 = arith.constant 1 : index
    %47 = memref.load %arg2[%c0_19, %c1_20] : memref<2x8xf32, #tpu.memory_space<smem>>
    %c0_21 = arith.constant 0 : index
    %c1_22 = arith.constant 1 : index
    %48 = memref.load %arg3[%c0_21, %c1_22] : memref<2x8xf32, #tpu.memory_space<smem>>
    %c0_23 = arith.constant 0 : index
    %c1_24 = arith.constant 1 : index
    %49 = memref.load %arg4[%c0_23, %c1_24] : memref<2x8xf32, #tpu.memory_space<smem>>
    %c0_25 = arith.constant 0 : index
    %c1_26 = arith.constant 1 : index
    %50 = memref.load %arg5[%c0_25, %c1_26] : memref<2x8xf32, #tpu.memory_space<smem>>
    %c0_27 = arith.constant 0 : index
    %c1_28 = arith.constant 1 : index
    %51 = memref.load %arg6[%c0_27, %c1_28] : memref<2x8xi32, #tpu.memory_space<smem>>
    %52 = vector.broadcast %47 : f32 to vector<8x128xf32>
    %53 = arith.subf %1, %52 : vector<8x128xf32>
    %54 = vector.broadcast %48 : f32 to vector<8x128xf32>
    %55 = arith.subf %3, %54 : vector<8x128xf32>
    %56 = vector.broadcast %49 : f32 to vector<8x128xf32>
    %57 = arith.subf %56, %1 : vector<8x128xf32>
    %58 = vector.broadcast %50 : f32 to vector<8x128xf32>
    %59 = arith.subf %58, %3 : vector<8x128xf32>
    %60 = arith.minimumf %53, %55 : vector<8x128xf32>
    %61 = arith.minimumf %57, %59 : vector<8x128xf32>
    %62 = arith.minimumf %60, %61 : vector<8x128xf32>
    %63 = arith.maximumf %53, %55 : vector<8x128xf32>
    %64 = arith.maximumf %57, %59 : vector<8x128xf32>
    %65 = arith.maximumf %63, %64 : vector<8x128xf32>
    %66 = arith.subf %49, %47 : f32
    %67 = arith.subf %50, %48 : f32
    %68 = arith.mulf %66, %67 : f32
    %cst_29 = arith.constant 0.000000e+00 : f32
    %69 = vector.broadcast %cst_29 : f32 to vector<8x128xf32>
    %70 = arith.cmpf ogt, %62, %69 : vector<8x128xf32>
    %71 = arith.cmpf ogt, %65, %5 : vector<8x128xf32>
    %72 = arith.andi %70, %71 : vector<8x128xi1>
    %73 = arith.cmpf ole, %65, %7 : vector<8x128xf32>
    %74 = arith.andi %72, %73 : vector<8x128xi1>
    %75 = vector.broadcast %68 : f32 to vector<8x128xf32>
    %76 = arith.cmpf olt, %75, %43 : vector<8x128xf32>
    %77 = arith.andi %74, %76 : vector<8x128xi1>
    %78 = vector.broadcast %68 : f32 to vector<8x128xf32>
    %79 = arith.select %77, %78, %43 : vector<8x128xi1>, vector<8x128xf32>
    %80 = vector.broadcast %51 : i32 to vector<8x128xi32>
    %81 = arith.select %77, %80, %45 : vector<8x128xi1>, vector<8x128xi32>
    %82 = arith.ori %46, %74 : vector<8x128xi1>
    %c0_30 = arith.constant 0 : index
    %c2_31 = arith.constant 2 : index
    %83 = memref.load %arg2[%c0_30, %c2_31] : memref<2x8xf32, #tpu.memory_space<smem>>
    %c0_32 = arith.constant 0 : index
    %c2_33 = arith.constant 2 : index
    %84 = memref.load %arg3[%c0_32, %c2_33] : memref<2x8xf32, #tpu.memory_space<smem>>
    %c0_34 = arith.constant 0 : index
    %c2_35 = arith.constant 2 : index
    %85 = memref.load %arg4[%c0_34, %c2_35] : memref<2x8xf32, #tpu.memory_space<smem>>
    %c0_36 = arith.constant 0 : index
    %c2_37 = arith.constant 2 : index
    %86 = memref.load %arg5[%c0_36, %c2_37] : memref<2x8xf32, #tpu.memory_space<smem>>
    %c0_38 = arith.constant 0 : index
    %c2_39 = arith.constant 2 : index
    %87 = memref.load %arg6[%c0_38, %c2_39] : memref<2x8xi32, #tpu.memory_space<smem>>
    %88 = vector.broadcast %83 : f32 to vector<8x128xf32>
    %89 = arith.subf %1, %88 : vector<8x128xf32>
    %90 = vector.broadcast %84 : f32 to vector<8x128xf32>
    %91 = arith.subf %3, %90 : vector<8x128xf32>
    %92 = vector.broadcast %85 : f32 to vector<8x128xf32>
    %93 = arith.subf %92, %1 : vector<8x128xf32>
    %94 = vector.broadcast %86 : f32 to vector<8x128xf32>
    %95 = arith.subf %94, %3 : vector<8x128xf32>
    %96 = arith.minimumf %89, %91 : vector<8x128xf32>
    %97 = arith.minimumf %93, %95 : vector<8x128xf32>
    %98 = arith.minimumf %96, %97 : vector<8x128xf32>
    %99 = arith.maximumf %89, %91 : vector<8x128xf32>
    %100 = arith.maximumf %93, %95 : vector<8x128xf32>
    %101 = arith.maximumf %99, %100 : vector<8x128xf32>
    %102 = arith.subf %85, %83 : f32
    %103 = arith.subf %86, %84 : f32
    %104 = arith.mulf %102, %103 : f32
    %cst_40 = arith.constant 0.000000e+00 : f32
    %105 = vector.broadcast %cst_40 : f32 to vector<8x128xf32>
    %106 = arith.cmpf ogt, %98, %105 : vector<8x128xf32>
    %107 = arith.cmpf ogt, %101, %5 : vector<8x128xf32>
    %108 = arith.andi %106, %107 : vector<8x128xi1>
    %109 = arith.cmpf ole, %101, %7 : vector<8x128xf32>
    %110 = arith.andi %108, %109 : vector<8x128xi1>
    %111 = vector.broadcast %104 : f32 to vector<8x128xf32>
    %112 = arith.cmpf olt, %111, %79 : vector<8x128xf32>
    %113 = arith.andi %110, %112 : vector<8x128xi1>
    %114 = vector.broadcast %104 : f32 to vector<8x128xf32>
    %115 = arith.select %113, %114, %79 : vector<8x128xi1>, vector<8x128xf32>
    %116 = vector.broadcast %87 : i32 to vector<8x128xi32>
    %117 = arith.select %113, %116, %81 : vector<8x128xi1>, vector<8x128xi32>
    %118 = arith.ori %82, %110 : vector<8x128xi1>
    %c0_41 = arith.constant 0 : index
    %c3_42 = arith.constant 3 : index
    %119 = memref.load %arg2[%c0_41, %c3_42] : memref<2x8xf32, #tpu.memory_space<smem>>
    %c0_43 = arith.constant 0 : index
    %c3_44 = arith.constant 3 : index
    %120 = memref.load %arg3[%c0_43, %c3_44] : memref<2x8xf32, #tpu.memory_space<smem>>
    %c0_45 = arith.constant 0 : index
    %c3_46 = arith.constant 3 : index
    %121 = memref.load %arg4[%c0_45, %c3_46] : memref<2x8xf32, #tpu.memory_space<smem>>
    %c0_47 = arith.constant 0 : index
    %c3_48 = arith.constant 3 : index
    %122 = memref.load %arg5[%c0_47, %c3_48] : memref<2x8xf32, #tpu.memory_space<smem>>
    %c0_49 = arith.constant 0 : index
    %c3_50 = arith.constant 3 : index
    %123 = memref.load %arg6[%c0_49, %c3_50] : memref<2x8xi32, #tpu.memory_space<smem>>
    %124 = vector.broadcast %119 : f32 to vector<8x128xf32>
    %125 = arith.subf %1, %124 : vector<8x128xf32>
    %126 = vector.broadcast %120 : f32 to vector<8x128xf32>
    %127 = arith.subf %3, %126 : vector<8x128xf32>
    %128 = vector.broadcast %121 : f32 to vector<8x128xf32>
    %129 = arith.subf %128, %1 : vector<8x128xf32>
    %130 = vector.broadcast %122 : f32 to vector<8x128xf32>
    %131 = arith.subf %130, %3 : vector<8x128xf32>
    %132 = arith.minimumf %125, %127 : vector<8x128xf32>
    %133 = arith.minimumf %129, %131 : vector<8x128xf32>
    %134 = arith.minimumf %132, %133 : vector<8x128xf32>
    %135 = arith.maximumf %125, %127 : vector<8x128xf32>
    %136 = arith.maximumf %129, %131 : vector<8x128xf32>
    %137 = arith.maximumf %135, %136 : vector<8x128xf32>
    %138 = arith.subf %121, %119 : f32
    %139 = arith.subf %122, %120 : f32
    %140 = arith.mulf %138, %139 : f32
    %cst_51 = arith.constant 0.000000e+00 : f32
    %141 = vector.broadcast %cst_51 : f32 to vector<8x128xf32>
    %142 = arith.cmpf ogt, %134, %141 : vector<8x128xf32>
    %143 = arith.cmpf ogt, %137, %5 : vector<8x128xf32>
    %144 = arith.andi %142, %143 : vector<8x128xi1>
    %145 = arith.cmpf ole, %137, %7 : vector<8x128xf32>
    %146 = arith.andi %144, %145 : vector<8x128xi1>
    %147 = vector.broadcast %140 : f32 to vector<8x128xf32>
    %148 = arith.cmpf olt, %147, %115 : vector<8x128xf32>
    %149 = arith.andi %146, %148 : vector<8x128xi1>
    %150 = vector.broadcast %140 : f32 to vector<8x128xf32>
    %151 = arith.select %149, %150, %115 : vector<8x128xi1>, vector<8x128xf32>
    %152 = vector.broadcast %123 : i32 to vector<8x128xi32>
    %153 = arith.select %149, %152, %117 : vector<8x128xi1>, vector<8x128xi32>
    %154 = arith.ori %118, %146 : vector<8x128xi1>
    %c0_52 = arith.constant 0 : index
    %c4 = arith.constant 4 : index
    %155 = memref.load %arg2[%c0_52, %c4] : memref<2x8xf32, #tpu.memory_space<smem>>
    %c0_53 = arith.constant 0 : index
    %c4_54 = arith.constant 4 : index
    %156 = memref.load %arg3[%c0_53, %c4_54] : memref<2x8xf32, #tpu.memory_space<smem>>
    %c0_55 = arith.constant 0 : index
    %c4_56 = arith.constant 4 : index
    %157 = memref.load %arg4[%c0_55, %c4_56] : memref<2x8xf32, #tpu.memory_space<smem>>
    %c0_57 = arith.constant 0 : index
    %c4_58 = arith.constant 4 : index
    %158 = memref.load %arg5[%c0_57, %c4_58] : memref<2x8xf32, #tpu.memory_space<smem>>
    %c0_59 = arith.constant 0 : index
    %c4_60 = arith.constant 4 : index
    %159 = memref.load %arg6[%c0_59, %c4_60] : memref<2x8xi32, #tpu.memory_space<smem>>
    %160 = vector.broadcast %155 : f32 to vector<8x128xf32>
    %161 = arith.subf %1, %160 : vector<8x128xf32>
    %162 = vector.broadcast %156 : f32 to vector<8x128xf32>
    %163 = arith.subf %3, %162 : vector<8x128xf32>
    %164 = vector.broadcast %157 : f32 to vector<8x128xf32>
    %165 = arith.subf %164, %1 : vector<8x128xf32>
    %166 = vector.broadcast %158 : f32 to vector<8x128xf32>
    %167 = arith.subf %166, %3 : vector<8x128xf32>
    %168 = arith.minimumf %161, %163 : vector<8x128xf32>
    %169 = arith.minimumf %165, %167 : vector<8x128xf32>
    %170 = arith.minimumf %168, %169 : vector<8x128xf32>
    %171 = arith.maximumf %161, %163 : vector<8x128xf32>
    %172 = arith.maximumf %165, %167 : vector<8x128xf32>
    %173 = arith.maximumf %171, %172 : vector<8x128xf32>
    %174 = arith.subf %157, %155 : f32
    %175 = arith.subf %158, %156 : f32
    %176 = arith.mulf %174, %175 : f32
    %cst_61 = arith.constant 0.000000e+00 : f32
    %177 = vector.broadcast %cst_61 : f32 to vector<8x128xf32>
    %178 = arith.cmpf ogt, %170, %177 : vector<8x128xf32>
    %179 = arith.cmpf ogt, %173, %5 : vector<8x128xf32>
    %180 = arith.andi %178, %179 : vector<8x128xi1>
    %181 = arith.cmpf ole, %173, %7 : vector<8x128xf32>
    %182 = arith.andi %180, %181 : vector<8x128xi1>
    %183 = vector.broadcast %176 : f32 to vector<8x128xf32>
    %184 = arith.cmpf olt, %183, %151 : vector<8x128xf32>
    %185 = arith.andi %182, %184 : vector<8x128xi1>
    %186 = vector.broadcast %176 : f32 to vector<8x128xf32>
    %187 = arith.select %185, %186, %151 : vector<8x128xi1>, vector<8x128xf32>
    %188 = vector.broadcast %159 : i32 to vector<8x128xi32>
    %189 = arith.select %185, %188, %153 : vector<8x128xi1>, vector<8x128xi32>
    %190 = arith.ori %154, %182 : vector<8x128xi1>
    %c0_62 = arith.constant 0 : index
    %c5 = arith.constant 5 : index
    %191 = memref.load %arg2[%c0_62, %c5] : memref<2x8xf32, #tpu.memory_space<smem>>
    %c0_63 = arith.constant 0 : index
    %c5_64 = arith.constant 5 : index
    %192 = memref.load %arg3[%c0_63, %c5_64] : memref<2x8xf32, #tpu.memory_space<smem>>
    %c0_65 = arith.constant 0 : index
    %c5_66 = arith.constant 5 : index
    %193 = memref.load %arg4[%c0_65, %c5_66] : memref<2x8xf32, #tpu.memory_space<smem>>
    %c0_67 = arith.constant 0 : index
    %c5_68 = arith.constant 5 : index
    %194 = memref.load %arg5[%c0_67, %c5_68] : memref<2x8xf32, #tpu.memory_space<smem>>
    %c0_69 = arith.constant 0 : index
    %c5_70 = arith.constant 5 : index
    %195 = memref.load %arg6[%c0_69, %c5_70] : memref<2x8xi32, #tpu.memory_space<smem>>
    %196 = vector.broadcast %191 : f32 to vector<8x128xf32>
    %197 = arith.subf %1, %196 : vector<8x128xf32>
    %198 = vector.broadcast %192 : f32 to vector<8x128xf32>
    %199 = arith.subf %3, %198 : vector<8x128xf32>
    %200 = vector.broadcast %193 : f32 to vector<8x128xf32>
    %201 = arith.subf %200, %1 : vector<8x128xf32>
    %202 = vector.broadcast %194 : f32 to vector<8x128xf32>
    %203 = arith.subf %202, %3 : vector<8x128xf32>
    %204 = arith.minimumf %197, %199 : vector<8x128xf32>
    %205 = arith.minimumf %201, %203 : vector<8x128xf32>
    %206 = arith.minimumf %204, %205 : vector<8x128xf32>
    %207 = arith.maximumf %197, %199 : vector<8x128xf32>
    %208 = arith.maximumf %201, %203 : vector<8x128xf32>
    %209 = arith.maximumf %207, %208 : vector<8x128xf32>
    %210 = arith.subf %193, %191 : f32
    %211 = arith.subf %194, %192 : f32
    %212 = arith.mulf %210, %211 : f32
    %cst_71 = arith.constant 0.000000e+00 : f32
    %213 = vector.broadcast %cst_71 : f32 to vector<8x128xf32>
    %214 = arith.cmpf ogt, %206, %213 : vector<8x128xf32>
    %215 = arith.cmpf ogt, %209, %5 : vector<8x128xf32>
    %216 = arith.andi %214, %215 : vector<8x128xi1>
    %217 = arith.cmpf ole, %209, %7 : vector<8x128xf32>
    %218 = arith.andi %216, %217 : vector<8x128xi1>
    %219 = vector.broadcast %212 : f32 to vector<8x128xf32>
    %220 = arith.cmpf olt, %219, %187 : vector<8x128xf32>
    %221 = arith.andi %218, %220 : vector<8x128xi1>
    %222 = vector.broadcast %212 : f32 to vector<8x128xf32>
    %223 = arith.select %221, %222, %187 : vector<8x128xi1>, vector<8x128xf32>
    %224 = vector.broadcast %195 : i32 to vector<8x128xi32>
    %225 = arith.select %221, %224, %189 : vector<8x128xi1>, vector<8x128xi32>
    %226 = arith.ori %190, %218 : vector<8x128xi1>
    %c0_72 = arith.constant 0 : index
    %c6 = arith.constant 6 : index
    %227 = memref.load %arg2[%c0_72, %c6] : memref<2x8xf32, #tpu.memory_space<smem>>
    %c0_73 = arith.constant 0 : index
    %c6_74 = arith.constant 6 : index
    %228 = memref.load %arg3[%c0_73, %c6_74] : memref<2x8xf32, #tpu.memory_space<smem>>
    %c0_75 = arith.constant 0 : index
    %c6_76 = arith.constant 6 : index
    %229 = memref.load %arg4[%c0_75, %c6_76] : memref<2x8xf32, #tpu.memory_space<smem>>
    %c0_77 = arith.constant 0 : index
    %c6_78 = arith.constant 6 : index
    %230 = memref.load %arg5[%c0_77, %c6_78] : memref<2x8xf32, #tpu.memory_space<smem>>
    %c0_79 = arith.constant 0 : index
    %c6_80 = arith.constant 6 : index
    %231 = memref.load %arg6[%c0_79, %c6_80] : memref<2x8xi32, #tpu.memory_space<smem>>
    %232 = vector.broadcast %227 : f32 to vector<8x128xf32>
    %233 = arith.subf %1, %232 : vector<8x128xf32>
    %234 = vector.broadcast %228 : f32 to vector<8x128xf32>
    %235 = arith.subf %3, %234 : vector<8x128xf32>
    %236 = vector.broadcast %229 : f32 to vector<8x128xf32>
    %237 = arith.subf %236, %1 : vector<8x128xf32>
    %238 = vector.broadcast %230 : f32 to vector<8x128xf32>
    %239 = arith.subf %238, %3 : vector<8x128xf32>
    %240 = arith.minimumf %233, %235 : vector<8x128xf32>
    %241 = arith.minimumf %237, %239 : vector<8x128xf32>
    %242 = arith.minimumf %240, %241 : vector<8x128xf32>
    %243 = arith.maximumf %233, %235 : vector<8x128xf32>
    %244 = arith.maximumf %237, %239 : vector<8x128xf32>
    %245 = arith.maximumf %243, %244 : vector<8x128xf32>
    %246 = arith.subf %229, %227 : f32
    %247 = arith.subf %230, %228 : f32
    %248 = arith.mulf %246, %247 : f32
    %cst_81 = arith.constant 0.000000e+00 : f32
    %249 = vector.broadcast %cst_81 : f32 to vector<8x128xf32>
    %250 = arith.cmpf ogt, %242, %249 : vector<8x128xf32>
    %251 = arith.cmpf ogt, %245, %5 : vector<8x128xf32>
    %252 = arith.andi %250, %251 : vector<8x128xi1>
    %253 = arith.cmpf ole, %245, %7 : vector<8x128xf32>
    %254 = arith.andi %252, %253 : vector<8x128xi1>
    %255 = vector.broadcast %248 : f32 to vector<8x128xf32>
    %256 = arith.cmpf olt, %255, %223 : vector<8x128xf32>
    %257 = arith.andi %254, %256 : vector<8x128xi1>
    %258 = vector.broadcast %248 : f32 to vector<8x128xf32>
    %259 = arith.select %257, %258, %223 : vector<8x128xi1>, vector<8x128xf32>
    %260 = vector.broadcast %231 : i32 to vector<8x128xi32>
    %261 = arith.select %257, %260, %225 : vector<8x128xi1>, vector<8x128xi32>
    %262 = arith.ori %226, %254 : vector<8x128xi1>
    %c0_82 = arith.constant 0 : index
    %c7 = arith.constant 7 : index
    %263 = memref.load %arg2[%c0_82, %c7] : memref<2x8xf32, #tpu.memory_space<smem>>
    %c0_83 = arith.constant 0 : index
    %c7_84 = arith.constant 7 : index
    %264 = memref.load %arg3[%c0_83, %c7_84] : memref<2x8xf32, #tpu.memory_space<smem>>
    %c0_85 = arith.constant 0 : index
    %c7_86 = arith.constant 7 : index
    %265 = memref.load %arg4[%c0_85, %c7_86] : memref<2x8xf32, #tpu.memory_space<smem>>
    %c0_87 = arith.constant 0 : index
    %c7_88 = arith.constant 7 : index
    %266 = memref.load %arg5[%c0_87, %c7_88] : memref<2x8xf32, #tpu.memory_space<smem>>
    %c0_89 = arith.constant 0 : index
    %c7_90 = arith.constant 7 : index
    %267 = memref.load %arg6[%c0_89, %c7_90] : memref<2x8xi32, #tpu.memory_space<smem>>
    %268 = vector.broadcast %263 : f32 to vector<8x128xf32>
    %269 = arith.subf %1, %268 : vector<8x128xf32>
    %270 = vector.broadcast %264 : f32 to vector<8x128xf32>
    %271 = arith.subf %3, %270 : vector<8x128xf32>
    %272 = vector.broadcast %265 : f32 to vector<8x128xf32>
    %273 = arith.subf %272, %1 : vector<8x128xf32>
    %274 = vector.broadcast %266 : f32 to vector<8x128xf32>
    %275 = arith.subf %274, %3 : vector<8x128xf32>
    %276 = arith.minimumf %269, %271 : vector<8x128xf32>
    %277 = arith.minimumf %273, %275 : vector<8x128xf32>
    %278 = arith.minimumf %276, %277 : vector<8x128xf32>
    %279 = arith.maximumf %269, %271 : vector<8x128xf32>
    %280 = arith.maximumf %273, %275 : vector<8x128xf32>
    %281 = arith.maximumf %279, %280 : vector<8x128xf32>
    %282 = arith.subf %265, %263 : f32
    %283 = arith.subf %266, %264 : f32
    %284 = arith.mulf %282, %283 : f32
    %cst_91 = arith.constant 0.000000e+00 : f32
    %285 = vector.broadcast %cst_91 : f32 to vector<8x128xf32>
    %286 = arith.cmpf ogt, %278, %285 : vector<8x128xf32>
    %287 = arith.cmpf ogt, %281, %5 : vector<8x128xf32>
    %288 = arith.andi %286, %287 : vector<8x128xi1>
    %289 = arith.cmpf ole, %281, %7 : vector<8x128xf32>
    %290 = arith.andi %288, %289 : vector<8x128xi1>
    %291 = vector.broadcast %284 : f32 to vector<8x128xf32>
    %292 = arith.cmpf olt, %291, %259 : vector<8x128xf32>
    %293 = arith.andi %290, %292 : vector<8x128xi1>
    %294 = vector.broadcast %267 : i32 to vector<8x128xi32>
    %295 = arith.select %293, %294, %261 : vector<8x128xi1>, vector<8x128xi32>
    %296 = arith.ori %262, %290 : vector<8x128xi1>
    %c0_i32_92 = arith.constant 0 : i32
    %297 = vector.broadcast %c0_i32_92 : i32 to vector<8x128xi32>
    %298 = arith.select %296, %295, %297 : vector<8x128xi1>, vector<8x128xi32>
    %c0_93 = arith.constant 0 : index
    %c0_94 = arith.constant 0 : index
    %c0_95 = arith.constant 0 : index
    %299 = vector.load %arg7[%c0_93, %c0_94, %c0_95] : memref<2x8x128xi32, #tpu.memory_space<vmem>>, vector<1x8x128xi32>
    %300 = vector.shape_cast %299 : vector<1x8x128xi32> to vector<8x128xi32>
    %301 = vector.shape_cast %298 : vector<8x128xi32> to vector<1x8x128xi32>
    tpu.vector_store %arg7[%c0_93, %c0_94, %c0_95], %301 {strides = array<i32>} : memref<2x8x128xi32, #tpu.memory_space<vmem>>, vector<1x8x128xi32>,
    %cst_96 = arith.constant 1.000000e+08 : f32
    %302 = vector.broadcast %cst_96 : f32 to vector<8x128xf32>
    %c0_i32_97 = arith.constant 0 : i32
    %303 = vector.broadcast %c0_i32_97 : i32 to vector<8x128xi32>
    %false_98 = arith.constant false
    %304 = vector.broadcast %false_98 : i1 to vector<8x128xi1>
    %c1_99 = arith.constant 1 : index
    %c0_100 = arith.constant 0 : index
    %305 = memref.load %arg2[%c1_99, %c0_100] : memref<2x8xf32, #tpu.memory_space<smem>>
    %c1_101 = arith.constant 1 : index
    %c0_102 = arith.constant 0 : index
    %306 = memref.load %arg3[%c1_101, %c0_102] : memref<2x8xf32, #tpu.memory_space<smem>>
    %c1_103 = arith.constant 1 : index
    %c0_104 = arith.constant 0 : index
    %307 = memref.load %arg4[%c1_103, %c0_104] : memref<2x8xf32, #tpu.memory_space<smem>>
    %c1_105 = arith.constant 1 : index
    %c0_106 = arith.constant 0 : index
    %308 = memref.load %arg5[%c1_105, %c0_106] : memref<2x8xf32, #tpu.memory_space<smem>>
    %c1_107 = arith.constant 1 : index
    %c0_108 = arith.constant 0 : index
    %309 = memref.load %arg6[%c1_107, %c0_108] : memref<2x8xi32, #tpu.memory_space<smem>>
    %310 = vector.broadcast %305 : f32 to vector<8x128xf32>
    %311 = arith.subf %1, %310 : vector<8x128xf32>
    %312 = vector.broadcast %306 : f32 to vector<8x128xf32>
    %313 = arith.subf %3, %312 : vector<8x128xf32>
    %314 = vector.broadcast %307 : f32 to vector<8x128xf32>
    %315 = arith.subf %314, %1 : vector<8x128xf32>
    %316 = vector.broadcast %308 : f32 to vector<8x128xf32>
    %317 = arith.subf %316, %3 : vector<8x128xf32>
    %318 = arith.minimumf %311, %313 : vector<8x128xf32>
    %319 = arith.minimumf %315, %317 : vector<8x128xf32>
    %320 = arith.minimumf %318, %319 : vector<8x128xf32>
    %321 = arith.maximumf %311, %313 : vector<8x128xf32>
    %322 = arith.maximumf %315, %317 : vector<8x128xf32>
    %323 = arith.maximumf %321, %322 : vector<8x128xf32>
    %324 = arith.subf %307, %305 : f32
    %325 = arith.subf %308, %306 : f32
    %326 = arith.mulf %324, %325 : f32
    %cst_109 = arith.constant 0.000000e+00 : f32
    %327 = vector.broadcast %cst_109 : f32 to vector<8x128xf32>
    %328 = arith.cmpf ogt, %320, %327 : vector<8x128xf32>
    %329 = arith.cmpf ogt, %323, %5 : vector<8x128xf32>
    %330 = arith.andi %328, %329 : vector<8x128xi1>
    %331 = arith.cmpf ole, %323, %7 : vector<8x128xf32>
    %332 = arith.andi %330, %331 : vector<8x128xi1>
    %333 = vector.broadcast %326 : f32 to vector<8x128xf32>
    %334 = arith.cmpf olt, %333, %302 : vector<8x128xf32>
    %335 = arith.andi %332, %334 : vector<8x128xi1>
    %336 = vector.broadcast %326 : f32 to vector<8x128xf32>
    %337 = arith.select %335, %336, %302 : vector<8x128xi1>, vector<8x128xf32>
    %338 = vector.broadcast %309 : i32 to vector<8x128xi32>
    %339 = arith.select %335, %338, %303 : vector<8x128xi1>, vector<8x128xi32>
    %340 = arith.ori %304, %332 : vector<8x128xi1>
    %c1_110 = arith.constant 1 : index
    %c1_111 = arith.constant 1 : index
    %341 = memref.load %arg2[%c1_110, %c1_111] : memref<2x8xf32, #tpu.memory_space<smem>>
    %c1_112 = arith.constant 1 : index
    %c1_113 = arith.constant 1 : index
    %342 = memref.load %arg3[%c1_112, %c1_113] : memref<2x8xf32, #tpu.memory_space<smem>>
    %c1_114 = arith.constant 1 : index
    %c1_115 = arith.constant 1 : index
    %343 = memref.load %arg4[%c1_114, %c1_115] : memref<2x8xf32, #tpu.memory_space<smem>>
    %c1_116 = arith.constant 1 : index
    %c1_117 = arith.constant 1 : index
    %344 = memref.load %arg5[%c1_116, %c1_117] : memref<2x8xf32, #tpu.memory_space<smem>>
    %c1_118 = arith.constant 1 : index
    %c1_119 = arith.constant 1 : index
    %345 = memref.load %arg6[%c1_118, %c1_119] : memref<2x8xi32, #tpu.memory_space<smem>>
    %346 = vector.broadcast %341 : f32 to vector<8x128xf32>
    %347 = arith.subf %1, %346 : vector<8x128xf32>
    %348 = vector.broadcast %342 : f32 to vector<8x128xf32>
    %349 = arith.subf %3, %348 : vector<8x128xf32>
    %350 = vector.broadcast %343 : f32 to vector<8x128xf32>
    %351 = arith.subf %350, %1 : vector<8x128xf32>
    %352 = vector.broadcast %344 : f32 to vector<8x128xf32>
    %353 = arith.subf %352, %3 : vector<8x128xf32>
    %354 = arith.minimumf %347, %349 : vector<8x128xf32>
    %355 = arith.minimumf %351, %353 : vector<8x128xf32>
    %356 = arith.minimumf %354, %355 : vector<8x128xf32>
    %357 = arith.maximumf %347, %349 : vector<8x128xf32>
    %358 = arith.maximumf %351, %353 : vector<8x128xf32>
    %359 = arith.maximumf %357, %358 : vector<8x128xf32>
    %360 = arith.subf %343, %341 : f32
    %361 = arith.subf %344, %342 : f32
    %362 = arith.mulf %360, %361 : f32
    %cst_120 = arith.constant 0.000000e+00 : f32
    %363 = vector.broadcast %cst_120 : f32 to vector<8x128xf32>
    %364 = arith.cmpf ogt, %356, %363 : vector<8x128xf32>
    %365 = arith.cmpf ogt, %359, %5 : vector<8x128xf32>
    %366 = arith.andi %364, %365 : vector<8x128xi1>
    %367 = arith.cmpf ole, %359, %7 : vector<8x128xf32>
    %368 = arith.andi %366, %367 : vector<8x128xi1>
    %369 = vector.broadcast %362 : f32 to vector<8x128xf32>
    %370 = arith.cmpf olt, %369, %337 : vector<8x128xf32>
    %371 = arith.andi %368, %370 : vector<8x128xi1>
    %372 = vector.broadcast %362 : f32 to vector<8x128xf32>
    %373 = arith.select %371, %372, %337 : vector<8x128xi1>, vector<8x128xf32>
    %374 = vector.broadcast %345 : i32 to vector<8x128xi32>
    %375 = arith.select %371, %374, %339 : vector<8x128xi1>, vector<8x128xi32>
    %376 = arith.ori %340, %368 : vector<8x128xi1>
    %c1_121 = arith.constant 1 : index
    %c2_122 = arith.constant 2 : index
    %377 = memref.load %arg2[%c1_121, %c2_122] : memref<2x8xf32, #tpu.memory_space<smem>>
    %c1_123 = arith.constant 1 : index
    %c2_124 = arith.constant 2 : index
    %378 = memref.load %arg3[%c1_123, %c2_124] : memref<2x8xf32, #tpu.memory_space<smem>>
    %c1_125 = arith.constant 1 : index
    %c2_126 = arith.constant 2 : index
    %379 = memref.load %arg4[%c1_125, %c2_126] : memref<2x8xf32, #tpu.memory_space<smem>>
    %c1_127 = arith.constant 1 : index
    %c2_128 = arith.constant 2 : index
    %380 = memref.load %arg5[%c1_127, %c2_128] : memref<2x8xf32, #tpu.memory_space<smem>>
    %c1_129 = arith.constant 1 : index
    %c2_130 = arith.constant 2 : index
    %381 = memref.load %arg6[%c1_129, %c2_130] : memref<2x8xi32, #tpu.memory_space<smem>>
    %382 = vector.broadcast %377 : f32 to vector<8x128xf32>
    %383 = arith.subf %1, %382 : vector<8x128xf32>
    %384 = vector.broadcast %378 : f32 to vector<8x128xf32>
    %385 = arith.subf %3, %384 : vector<8x128xf32>
    %386 = vector.broadcast %379 : f32 to vector<8x128xf32>
    %387 = arith.subf %386, %1 : vector<8x128xf32>
    %388 = vector.broadcast %380 : f32 to vector<8x128xf32>
    %389 = arith.subf %388, %3 : vector<8x128xf32>
    %390 = arith.minimumf %383, %385 : vector<8x128xf32>
    %391 = arith.minimumf %387, %389 : vector<8x128xf32>
    %392 = arith.minimumf %390, %391 : vector<8x128xf32>
    %393 = arith.maximumf %383, %385 : vector<8x128xf32>
    %394 = arith.maximumf %387, %389 : vector<8x128xf32>
    %395 = arith.maximumf %393, %394 : vector<8x128xf32>
    %396 = arith.subf %379, %377 : f32
    %397 = arith.subf %380, %378 : f32
    %398 = arith.mulf %396, %397 : f32
    %cst_131 = arith.constant 0.000000e+00 : f32
    %399 = vector.broadcast %cst_131 : f32 to vector<8x128xf32>
    %400 = arith.cmpf ogt, %392, %399 : vector<8x128xf32>
    %401 = arith.cmpf ogt, %395, %5 : vector<8x128xf32>
    %402 = arith.andi %400, %401 : vector<8x128xi1>
    %403 = arith.cmpf ole, %395, %7 : vector<8x128xf32>
    %404 = arith.andi %402, %403 : vector<8x128xi1>
    %405 = vector.broadcast %398 : f32 to vector<8x128xf32>
    %406 = arith.cmpf olt, %405, %373 : vector<8x128xf32>
    %407 = arith.andi %404, %406 : vector<8x128xi1>
    %408 = vector.broadcast %398 : f32 to vector<8x128xf32>
    %409 = arith.select %407, %408, %373 : vector<8x128xi1>, vector<8x128xf32>
    %410 = vector.broadcast %381 : i32 to vector<8x128xi32>
    %411 = arith.select %407, %410, %375 : vector<8x128xi1>, vector<8x128xi32>
    %412 = arith.ori %376, %404 : vector<8x128xi1>
    %c1_132 = arith.constant 1 : index
    %c3_133 = arith.constant 3 : index
    %413 = memref.load %arg2[%c1_132, %c3_133] : memref<2x8xf32, #tpu.memory_space<smem>>
    %c1_134 = arith.constant 1 : index
    %c3_135 = arith.constant 3 : index
    %414 = memref.load %arg3[%c1_134, %c3_135] : memref<2x8xf32, #tpu.memory_space<smem>>
    %c1_136 = arith.constant 1 : index
    %c3_137 = arith.constant 3 : index
    %415 = memref.load %arg4[%c1_136, %c3_137] : memref<2x8xf32, #tpu.memory_space<smem>>
    %c1_138 = arith.constant 1 : index
    %c3_139 = arith.constant 3 : index
    %416 = memref.load %arg5[%c1_138, %c3_139] : memref<2x8xf32, #tpu.memory_space<smem>>
    %c1_140 = arith.constant 1 : index
    %c3_141 = arith.constant 3 : index
    %417 = memref.load %arg6[%c1_140, %c3_141] : memref<2x8xi32, #tpu.memory_space<smem>>
    %418 = vector.broadcast %413 : f32 to vector<8x128xf32>
    %419 = arith.subf %1, %418 : vector<8x128xf32>
    %420 = vector.broadcast %414 : f32 to vector<8x128xf32>
    %421 = arith.subf %3, %420 : vector<8x128xf32>
    %422 = vector.broadcast %415 : f32 to vector<8x128xf32>
    %423 = arith.subf %422, %1 : vector<8x128xf32>
    %424 = vector.broadcast %416 : f32 to vector<8x128xf32>
    %425 = arith.subf %424, %3 : vector<8x128xf32>
    %426 = arith.minimumf %419, %421 : vector<8x128xf32>
    %427 = arith.minimumf %423, %425 : vector<8x128xf32>
    %428 = arith.minimumf %426, %427 : vector<8x128xf32>
    %429 = arith.maximumf %419, %421 : vector<8x128xf32>
    %430 = arith.maximumf %423, %425 : vector<8x128xf32>
    %431 = arith.maximumf %429, %430 : vector<8x128xf32>
    %432 = arith.subf %415, %413 : f32
    %433 = arith.subf %416, %414 : f32
    %434 = arith.mulf %432, %433 : f32
    %cst_142 = arith.constant 0.000000e+00 : f32
    %435 = vector.broadcast %cst_142 : f32 to vector<8x128xf32>
    %436 = arith.cmpf ogt, %428, %435 : vector<8x128xf32>
    %437 = arith.cmpf ogt, %431, %5 : vector<8x128xf32>
    %438 = arith.andi %436, %437 : vector<8x128xi1>
    %439 = arith.cmpf ole, %431, %7 : vector<8x128xf32>
    %440 = arith.andi %438, %439 : vector<8x128xi1>
    %441 = vector.broadcast %434 : f32 to vector<8x128xf32>
    %442 = arith.cmpf olt, %441, %409 : vector<8x128xf32>
    %443 = arith.andi %440, %442 : vector<8x128xi1>
    %444 = vector.broadcast %434 : f32 to vector<8x128xf32>
    %445 = arith.select %443, %444, %409 : vector<8x128xi1>, vector<8x128xf32>
    %446 = vector.broadcast %417 : i32 to vector<8x128xi32>
    %447 = arith.select %443, %446, %411 : vector<8x128xi1>, vector<8x128xi32>
    %448 = arith.ori %412, %440 : vector<8x128xi1>
    %c1_143 = arith.constant 1 : index
    %c4_144 = arith.constant 4 : index
    %449 = memref.load %arg2[%c1_143, %c4_144] : memref<2x8xf32, #tpu.memory_space<smem>>
    %c1_145 = arith.constant 1 : index
    %c4_146 = arith.constant 4 : index
    %450 = memref.load %arg3[%c1_145, %c4_146] : memref<2x8xf32, #tpu.memory_space<smem>>
    %c1_147 = arith.constant 1 : index
    %c4_148 = arith.constant 4 : index
    %451 = memref.load %arg4[%c1_147, %c4_148] : memref<2x8xf32, #tpu.memory_space<smem>>
    %c1_149 = arith.constant 1 : index
    %c4_150 = arith.constant 4 : index
    %452 = memref.load %arg5[%c1_149, %c4_150] : memref<2x8xf32, #tpu.memory_space<smem>>
    %c1_151 = arith.constant 1 : index
    %c4_152 = arith.constant 4 : index
    %453 = memref.load %arg6[%c1_151, %c4_152] : memref<2x8xi32, #tpu.memory_space<smem>>
    %454 = vector.broadcast %449 : f32 to vector<8x128xf32>
    %455 = arith.subf %1, %454 : vector<8x128xf32>
    %456 = vector.broadcast %450 : f32 to vector<8x128xf32>
    %457 = arith.subf %3, %456 : vector<8x128xf32>
    %458 = vector.broadcast %451 : f32 to vector<8x128xf32>
    %459 = arith.subf %458, %1 : vector<8x128xf32>
    %460 = vector.broadcast %452 : f32 to vector<8x128xf32>
    %461 = arith.subf %460, %3 : vector<8x128xf32>
    %462 = arith.minimumf %455, %457 : vector<8x128xf32>
    %463 = arith.minimumf %459, %461 : vector<8x128xf32>
    %464 = arith.minimumf %462, %463 : vector<8x128xf32>
    %465 = arith.maximumf %455, %457 : vector<8x128xf32>
    %466 = arith.maximumf %459, %461 : vector<8x128xf32>
    %467 = arith.maximumf %465, %466 : vector<8x128xf32>
    %468 = arith.subf %451, %449 : f32
    %469 = arith.subf %452, %450 : f32
    %470 = arith.mulf %468, %469 : f32
    %cst_153 = arith.constant 0.000000e+00 : f32
    %471 = vector.broadcast %cst_153 : f32 to vector<8x128xf32>
    %472 = arith.cmpf ogt, %464, %471 : vector<8x128xf32>
    %473 = arith.cmpf ogt, %467, %5 : vector<8x128xf32>
    %474 = arith.andi %472, %473 : vector<8x128xi1>
    %475 = arith.cmpf ole, %467, %7 : vector<8x128xf32>
    %476 = arith.andi %474, %475 : vector<8x128xi1>
    %477 = vector.broadcast %470 : f32 to vector<8x128xf32>
    %478 = arith.cmpf olt, %477, %445 : vector<8x128xf32>
    %479 = arith.andi %476, %478 : vector<8x128xi1>
    %480 = vector.broadcast %470 : f32 to vector<8x128xf32>
    %481 = arith.select %479, %480, %445 : vector<8x128xi1>, vector<8x128xf32>
    %482 = vector.broadcast %453 : i32 to vector<8x128xi32>
    %483 = arith.select %479, %482, %447 : vector<8x128xi1>, vector<8x128xi32>
    %484 = arith.ori %448, %476 : vector<8x128xi1>
    %c1_154 = arith.constant 1 : index
    %c5_155 = arith.constant 5 : index
    %485 = memref.load %arg2[%c1_154, %c5_155] : memref<2x8xf32, #tpu.memory_space<smem>>
    %c1_156 = arith.constant 1 : index
    %c5_157 = arith.constant 5 : index
    %486 = memref.load %arg3[%c1_156, %c5_157] : memref<2x8xf32, #tpu.memory_space<smem>>
    %c1_158 = arith.constant 1 : index
    %c5_159 = arith.constant 5 : index
    %487 = memref.load %arg4[%c1_158, %c5_159] : memref<2x8xf32, #tpu.memory_space<smem>>
    %c1_160 = arith.constant 1 : index
    %c5_161 = arith.constant 5 : index
    %488 = memref.load %arg5[%c1_160, %c5_161] : memref<2x8xf32, #tpu.memory_space<smem>>
    %c1_162 = arith.constant 1 : index
    %c5_163 = arith.constant 5 : index
    %489 = memref.load %arg6[%c1_162, %c5_163] : memref<2x8xi32, #tpu.memory_space<smem>>
    %490 = vector.broadcast %485 : f32 to vector<8x128xf32>
    %491 = arith.subf %1, %490 : vector<8x128xf32>
    %492 = vector.broadcast %486 : f32 to vector<8x128xf32>
    %493 = arith.subf %3, %492 : vector<8x128xf32>
    %494 = vector.broadcast %487 : f32 to vector<8x128xf32>
    %495 = arith.subf %494, %1 : vector<8x128xf32>
    %496 = vector.broadcast %488 : f32 to vector<8x128xf32>
    %497 = arith.subf %496, %3 : vector<8x128xf32>
    %498 = arith.minimumf %491, %493 : vector<8x128xf32>
    %499 = arith.minimumf %495, %497 : vector<8x128xf32>
    %500 = arith.minimumf %498, %499 : vector<8x128xf32>
    %501 = arith.maximumf %491, %493 : vector<8x128xf32>
    %502 = arith.maximumf %495, %497 : vector<8x128xf32>
    %503 = arith.maximumf %501, %502 : vector<8x128xf32>
    %504 = arith.subf %487, %485 : f32
    %505 = arith.subf %488, %486 : f32
    %506 = arith.mulf %504, %505 : f32
    %cst_164 = arith.constant 0.000000e+00 : f32
    %507 = vector.broadcast %cst_164 : f32 to vector<8x128xf32>
    %508 = arith.cmpf ogt, %500, %507 : vector<8x128xf32>
    %509 = arith.cmpf ogt, %503, %5 : vector<8x128xf32>
    %510 = arith.andi %508, %509 : vector<8x128xi1>
    %511 = arith.cmpf ole, %503, %7 : vector<8x128xf32>
    %512 = arith.andi %510, %511 : vector<8x128xi1>
    %513 = vector.broadcast %506 : f32 to vector<8x128xf32>
    %514 = arith.cmpf olt, %513, %481 : vector<8x128xf32>
    %515 = arith.andi %512, %514 : vector<8x128xi1>
    %516 = vector.broadcast %506 : f32 to vector<8x128xf32>
    %517 = arith.select %515, %516, %481 : vector<8x128xi1>, vector<8x128xf32>
    %518 = vector.broadcast %489 : i32 to vector<8x128xi32>
    %519 = arith.select %515, %518, %483 : vector<8x128xi1>, vector<8x128xi32>
    %520 = arith.ori %484, %512 : vector<8x128xi1>
    %c1_165 = arith.constant 1 : index
    %c6_166 = arith.constant 6 : index
    %521 = memref.load %arg2[%c1_165, %c6_166] : memref<2x8xf32, #tpu.memory_space<smem>>
    %c1_167 = arith.constant 1 : index
    %c6_168 = arith.constant 6 : index
    %522 = memref.load %arg3[%c1_167, %c6_168] : memref<2x8xf32, #tpu.memory_space<smem>>
    %c1_169 = arith.constant 1 : index
    %c6_170 = arith.constant 6 : index
    %523 = memref.load %arg4[%c1_169, %c6_170] : memref<2x8xf32, #tpu.memory_space<smem>>
    %c1_171 = arith.constant 1 : index
    %c6_172 = arith.constant 6 : index
    %524 = memref.load %arg5[%c1_171, %c6_172] : memref<2x8xf32, #tpu.memory_space<smem>>
    %c1_173 = arith.constant 1 : index
    %c6_174 = arith.constant 6 : index
    %525 = memref.load %arg6[%c1_173, %c6_174] : memref<2x8xi32, #tpu.memory_space<smem>>
    %526 = vector.broadcast %521 : f32 to vector<8x128xf32>
    %527 = arith.subf %1, %526 : vector<8x128xf32>
    %528 = vector.broadcast %522 : f32 to vector<8x128xf32>
    %529 = arith.subf %3, %528 : vector<8x128xf32>
    %530 = vector.broadcast %523 : f32 to vector<8x128xf32>
    %531 = arith.subf %530, %1 : vector<8x128xf32>
    %532 = vector.broadcast %524 : f32 to vector<8x128xf32>
    %533 = arith.subf %532, %3 : vector<8x128xf32>
    %534 = arith.minimumf %527, %529 : vector<8x128xf32>
    %535 = arith.minimumf %531, %533 : vector<8x128xf32>
    %536 = arith.minimumf %534, %535 : vector<8x128xf32>
    %537 = arith.maximumf %527, %529 : vector<8x128xf32>
    %538 = arith.maximumf %531, %533 : vector<8x128xf32>
    %539 = arith.maximumf %537, %538 : vector<8x128xf32>
    %540 = arith.subf %523, %521 : f32
    %541 = arith.subf %524, %522 : f32
    %542 = arith.mulf %540, %541 : f32
    %cst_175 = arith.constant 0.000000e+00 : f32
    %543 = vector.broadcast %cst_175 : f32 to vector<8x128xf32>
    %544 = arith.cmpf ogt, %536, %543 : vector<8x128xf32>
    %545 = arith.cmpf ogt, %539, %5 : vector<8x128xf32>
    %546 = arith.andi %544, %545 : vector<8x128xi1>
    %547 = arith.cmpf ole, %539, %7 : vector<8x128xf32>
    %548 = arith.andi %546, %547 : vector<8x128xi1>
    %549 = vector.broadcast %542 : f32 to vector<8x128xf32>
    %550 = arith.cmpf olt, %549, %517 : vector<8x128xf32>
    %551 = arith.andi %548, %550 : vector<8x128xi1>
    %552 = vector.broadcast %542 : f32 to vector<8x128xf32>
    %553 = arith.select %551, %552, %517 : vector<8x128xi1>, vector<8x128xf32>
    %554 = vector.broadcast %525 : i32 to vector<8x128xi32>
    %555 = arith.select %551, %554, %519 : vector<8x128xi1>, vector<8x128xi32>
    %556 = arith.ori %520, %548 : vector<8x128xi1>
    %c1_176 = arith.constant 1 : index
    %c7_177 = arith.constant 7 : index
    %557 = memref.load %arg2[%c1_176, %c7_177] : memref<2x8xf32, #tpu.memory_space<smem>>
    %c1_178 = arith.constant 1 : index
    %c7_179 = arith.constant 7 : index
    %558 = memref.load %arg3[%c1_178, %c7_179] : memref<2x8xf32, #tpu.memory_space<smem>>
    %c1_180 = arith.constant 1 : index
    %c7_181 = arith.constant 7 : index
    %559 = memref.load %arg4[%c1_180, %c7_181] : memref<2x8xf32, #tpu.memory_space<smem>>
    %c1_182 = arith.constant 1 : index
    %c7_183 = arith.constant 7 : index
    %560 = memref.load %arg5[%c1_182, %c7_183] : memref<2x8xf32, #tpu.memory_space<smem>>
    %c1_184 = arith.constant 1 : index
    %c7_185 = arith.constant 7 : index
    %561 = memref.load %arg6[%c1_184, %c7_185] : memref<2x8xi32, #tpu.memory_space<smem>>
    %562 = vector.broadcast %557 : f32 to vector<8x128xf32>
    %563 = arith.subf %1, %562 : vector<8x128xf32>
    %564 = vector.broadcast %558 : f32 to vector<8x128xf32>
    %565 = arith.subf %3, %564 : vector<8x128xf32>
    %566 = vector.broadcast %559 : f32 to vector<8x128xf32>
    %567 = arith.subf %566, %1 : vector<8x128xf32>
    %568 = vector.broadcast %560 : f32 to vector<8x128xf32>
    %569 = arith.subf %568, %3 : vector<8x128xf32>
    %570 = arith.minimumf %563, %565 : vector<8x128xf32>
    %571 = arith.minimumf %567, %569 : vector<8x128xf32>
    %572 = arith.minimumf %570, %571 : vector<8x128xf32>
    %573 = arith.maximumf %563, %565 : vector<8x128xf32>
    %574 = arith.maximumf %567, %569 : vector<8x128xf32>
    %575 = arith.maximumf %573, %574 : vector<8x128xf32>
    %576 = arith.subf %559, %557 : f32
    %577 = arith.subf %560, %558 : f32
    %578 = arith.mulf %576, %577 : f32
    %cst_186 = arith.constant 0.000000e+00 : f32
    %579 = vector.broadcast %cst_186 : f32 to vector<8x128xf32>
    %580 = arith.cmpf ogt, %572, %579 : vector<8x128xf32>
    %581 = arith.cmpf ogt, %575, %5 : vector<8x128xf32>
    %582 = arith.andi %580, %581 : vector<8x128xi1>
    %583 = arith.cmpf ole, %575, %7 : vector<8x128xf32>
    %584 = arith.andi %582, %583 : vector<8x128xi1>
    %585 = vector.broadcast %578 : f32 to vector<8x128xf32>
    %586 = arith.cmpf olt, %585, %553 : vector<8x128xf32>
    %587 = arith.andi %584, %586 : vector<8x128xi1>
    %588 = vector.broadcast %561 : i32 to vector<8x128xi32>
    %589 = arith.select %587, %588, %555 : vector<8x128xi1>, vector<8x128xi32>
    %590 = arith.ori %556, %584 : vector<8x128xi1>
    %c0_i32_187 = arith.constant 0 : i32
    %591 = vector.broadcast %c0_i32_187 : i32 to vector<8x128xi32>
    %592 = arith.select %590, %589, %591 : vector<8x128xi1>, vector<8x128xi32>
    %c1_188 = arith.constant 1 : index
    %c0_189 = arith.constant 0 : index
    %c0_190 = arith.constant 0 : index
    %593 = vector.load %arg7[%c1_188, %c0_189, %c0_190] : memref<2x8x128xi32, #tpu.memory_space<vmem>>, vector<1x8x128xi32>
    %594 = vector.shape_cast %593 : vector<1x8x128xi32> to vector<8x128xi32>
    %595 = vector.shape_cast %592 : vector<8x128xi32> to vector<1x8x128xi32>
    tpu.vector_store %arg7[%c1_188, %c0_189, %c0_190], %595 {strides = array<i32>} : memref<2x8x128xi32, #tpu.memory_space<vmem>>, vector<1x8x128xi32>,
    return
  }
  func.func @transform_0(%arg0: i32) -> (i32, i32, i32) {
    %c0_i32 = arith.constant 0 : i32
    %c0_i32_0 = arith.constant 0 : i32
    %c0_i32_1 = arith.constant 0 : i32
    return %c0_i32, %arg0, %c0_i32_0 : i32, i32, i32
  }
  func.func @transform_1(%arg0: i32) -> (i32, i32) {
    %c0_i32 = arith.constant 0 : i32
    %c0_i32_0 = arith.constant 0 : i32
    %c0_i32_1 = arith.constant 0 : i32
    return %c0_i32, %c0_i32_0 : i32, i32
  }
  func.func @transform_2(%arg0: i32) -> (i32, i32) {
    %c0_i32 = arith.constant 0 : i32
    %c0_i32_0 = arith.constant 0 : i32
    %c0_i32_1 = arith.constant 0 : i32
    return %c0_i32, %c0_i32_0 : i32, i32
  }
  func.func @transform_3(%arg0: i32) -> (i32, i32) {
    %c0_i32 = arith.constant 0 : i32
    %c0_i32_0 = arith.constant 0 : i32
    %c0_i32_1 = arith.constant 0 : i32
    return %c0_i32, %c0_i32_0 : i32, i32
  }
  func.func @transform_4(%arg0: i32) -> (i32, i32) {
    %c0_i32 = arith.constant 0 : i32
    %c0_i32_0 = arith.constant 0 : i32
    %c0_i32_1 = arith.constant 0 : i32
    return %c0_i32, %c0_i32_0 : i32, i32
  }
  func.func @transform_5(%arg0: i32) -> (i32, i32) {
    %c0_i32 = arith.constant 0 : i32
    %c0_i32_0 = arith.constant 0 : i32
    %c0_i32_1 = arith.constant 0 : i32
    return %c0_i32, %c0_i32_0 : i32, i32
  }
  func.func @transform_6(%arg0: i32) -> (i32, i32, i32) {
    %c0_i32 = arith.constant 0 : i32
    %c0_i32_0 = arith.constant 0 : i32
    %c0_i32_1 = arith.constant 0 : i32
    return %c0_i32, %arg0, %c0_i32_0 : i32, i32, i32
  }
}

</mosaic_0001>

<llo_original>
// kernel: tpu_custom_call.1
$region0: #{tpu_custom_call.1}
  #allocation0 [shape = 'u32[]', space=smem, size = 0x4, offset = 0x4, fixed_abs, tag = 'smem constant byte address 0x4 - core index']
  #allocation1 [shape = 'u32[144,128]{1,0:T(1,128)}', space=vmem, size = 0x12000, scoped, tag = 'internal scratch']
  %s0 = inlined_call_operand.hbm [shape: f32[4,16,128], index: 0, kind: input, shape index: {}]
  %s1 = inlined_call_operand.vmem [shape: f32[2,8], index: 1, kind: input, shape index: {}]
  %s2 = inlined_call_operand.vmem [shape: f32[2,8], index: 2, kind: input, shape index: {}]
  %s3 = inlined_call_operand.vmem [shape: f32[2,8], index: 3, kind: input, shape index: {}]
  %s4 = inlined_call_operand.vmem [shape: f32[2,8], index: 4, kind: input, shape index: {}]
  %s5 = inlined_call_operand.vmem [shape: s32[2,8], index: 5, kind: input, shape index: {}]
  %s6 = inlined_call_operand.hbm [shape: s32[2,16,128], index: 6, kind: output, shape index: {}]
  %s7 = sld [smem:[#allocation0]]
  $region81: #{tpu_custom_call.1} parent=0
    _
  %s9 = ssub.s32 1, %s7
  %s10 = scalar_select 0, %s9, %s7
  $region1: #{tpu_custom_call.1} parent=0
    #allocation2 [shape = 'u8[32768]{0}', space=vmem, size = 0x8000, scoped, tag = 'input window, operand 0']
    #allocation3 [shape = 's32[2]{0}', space=sflag, size = 0x8, scoped, tag = 'scoped memory for tpu_custom_call.1']
    #allocation4 [shape = 's32[2]{0}', space=sflag, size = 0x8, scoped, tag = 'scoped memory for tpu_custom_call.1']
    #allocation5 [shape = 's32[2]{0}', space=sflag, size = 0x8, scoped, tag = 'scoped memory for tpu_custom_call.1']
    #allocation6 [shape = 'u8[1024]{0}', space=smem, size = 0x400, scoped, tag = 'input window, operand 1, single buffered']
    #allocation7 [shape = 'u8[1024]{0}', space=smem, size = 0x400, scoped, tag = 'input window, operand 2, single buffered']
    #allocation8 [shape = 's32[1]{0}', space=sflag, size = 0x4, scoped, tag = 'scoped memory for tpu_custom_call.1']
    #allocation9 [shape = 'u8[1024]{0}', space=smem, size = 0x400, scoped, tag = 'input window, operand 3, single buffered']
    #allocation10 [shape = 'u8[1024]{0}', space=smem, size = 0x400, scoped, tag = 'input window, operand 4, single buffered']
    #allocation11 [shape = 's32[1]{0}', space=sflag, size = 0x4, scoped, tag = 'scoped memory for tpu_custom_call.1']
    #allocation12 [shape = 'u8[1024]{0}', space=smem, size = 0x400, scoped, tag = 'input window, operand 5, single buffered']
    #allocation13 [shape = 'u8[16384]{0}', space=vmem, size = 0x4000, scoped, tag = 'output window, operand 0']
    %11 = vsyncpa [#allocation3], 0
    %s12 = scalar_lea.sflag [#allocation3], 1
    %13 = vsyncpa %s12, 0
    %14 = vsyncpa [#allocation5], 0
    %15 = vsyncpa [#allocation8], 0
    %16 = vsyncpa [#allocation11], 0
    %17 = vsyncpa [#allocation4], 0
    %s18 = scalar_lea.sflag [#allocation4], 1
    %19 = vsyncpa %s18, 0
    loop: start=0, step=1, limit=4
    $region2: #{tpu_custom_call.1} parent=1 // loop_pre_header
      _
    $region3: #{tpu_custom_call.1} parent=1 // loop_header
      %s21 = sphi 0, %s25
      %p22 = scmp.ge.s32.totalorder %s21, 4
      %s31 = sphi 0, %s33
      %s34 = sphi 0, %s31
      %s35 = sphi 0, %s34
      %s51 = sphi 0, %s35
      %s55 = sphi 0, %s55
      %s57 = sphi 0, %s55
      %s58 = sphi 0, %s57
      %s72 = sphi 0, %s58
      %s76 = sphi 0, %s76
      %s78 = sphi 0, %s76
      %s79 = sphi 0, %s78
      %s93 = sphi 0, %s79
      %s97 = sphi 0, %s97
      %s99 = sphi 0, %s97
      %s100 = sphi 0, %s99
      %s114 = sphi 0, %s100
      %s118 = sphi 0, %s118
      %s120 = sphi 0, %s118
      %s121 = sphi 0, %s120
      %s135 = sphi 0, %s121
      %s139 = sphi 0, %s139
      %s141 = sphi 0, %s139
      %s142 = sphi 0, %s141
      %s156 = sphi 0, %s142
      %s162 = sphi 0, %s164
      %s165 = sphi 0, %s162
      %s166 = sphi 0, %s165
      %s182 = sphi 0, %s166
    $region4: #{tpu_custom_call.1} parent=1 // loop_header_branch
      %24 = sbr.rel (%p22) target = $region8
    $region5: #{tpu_custom_call.1} parent=1 // loop_body
      %s26 = ssub.s32 %s21, 1
      %s27 = ssub.s32 %s21, 2
      %s28 = sadd.s32 %s21, 1
      %s29 = ssub.s32 %s21, %s28
      %p30 = scmp.eq.s32.totalorder %s29, 0
      %s32 = sadd.s32 %s31, 1
      %s33 = scalar_select %p30, %s31, %s32
      %p36 = pneg %p30
      %p37 = scmp.eq.s32.totalorder %s21, 1
      %p38 = por %p36, %p37
      %p39 = scmp.ne.s32.totalorder %s31, %s34
      %p40 = scmp.eq.s32.totalorder %s21, 0
      %p41 = por %p39, %p40
      %p42 = scmp.ne.s32.totalorder %s31, %s34
      %p43 = scmp.eq.s32.totalorder %s26, 1
      %p44 = por %p42, %p43
      %p45 = scmp.ne.s32.totalorder %s34, %s35
      %p46 = scmp.eq.s32.totalorder %s26, 0
      %p47 = por %p45, %p46
      %p48 = scmp.ne.s32.totalorder %s34, %s35
      %p49 = scmp.eq.s32.totalorder %s27, 1
      %p50 = por %p48, %p49
      %p52 = scmp.ne.s32.totalorder %s35, %s51
      %p53 = scmp.eq.s32.totalorder %s27, 0
      %p54 = por %p52, %p53
      %s56 = sadd.s32 %s55, 1
      %p59 = scmp.eq.s32.totalorder %s21, 1
      %p60 = scmp.ne.s32.totalorder %s55, %s57
      %p61 = scmp.eq.s32.totalorder %s21, 0
      %p62 = por %p60, %p61
      %p63 = scmp.ne.s32.totalorder %s55, %s57
      %p64 = scmp.eq.s32.totalorder %s26, 1
      %p65 = por %p63, %p64
      %p66 = scmp.ne.s32.totalorder %s57, %s58
      %p67 = scmp.eq.s32.totalorder %s26, 0
      %p68 = por %p66, %p67
      %p69 = scmp.ne.s32.totalorder %s57, %s58
      %p70 = scmp.eq.s32.totalorder %s27, 1
      %p71 = por %p69, %p70
      %p73 = scmp.ne.s32.totalorder %s58, %s72
      %p74 = scmp.eq.s32.totalorder %s27, 0
      %p75 = por %p73, %p74
      %s77 = sadd.s32 %s76, 1
      %p80 = scmp.eq.s32.totalorder %s21, 1
      %p81 = scmp.ne.s32.totalorder %s76, %s78
      %p82 = scmp.eq.s32.totalorder %s21, 0
      %p83 = por %p81, %p82
      %p84 = scmp.ne.s32.totalorder %s76, %s78
      %p85 = scmp.eq.s32.totalorder %s26, 1
      %p86 = por %p84, %p85
      %p87 = scmp.ne.s32.totalorder %s78, %s79
      %p88 = scmp.eq.s32.totalorder %s26, 0
      %p89 = por %p87, %p88
      %p90 = scmp.ne.s32.totalorder %s78, %s79
      %p91 = scmp.eq.s32.totalorder %s27, 1
      %p92 = por %p90, %p91
      %p94 = scmp.ne.s32.totalorder %s79, %s93
      %p95 = scmp.eq.s32.totalorder %s27, 0
      %p96 = por %p94, %p95
      %s98 = sadd.s32 %s97, 1
      %p101 = scmp.eq.s32.totalorder %s21, 1
      %p102 = scmp.ne.s32.totalorder %s97, %s99
      %p103 = scmp.eq.s32.totalorder %s21, 0
      %p104 = por %p102, %p103
      %p105 = scmp.ne.s32.totalorder %s97, %s99
      %p106 = scmp.eq.s32.totalorder %s26, 1
      %p107 = por %p105, %p106
      %p108 = scmp.ne.s32.totalorder %s99, %s100
      %p109 = scmp.eq.s32.totalorder %s26, 0
      %p110 = por %p108, %p109
      %p111 = scmp.ne.s32.totalorder %s99, %s100
      %p112 = scmp.eq.s32.totalorder %s27, 1
      %p113 = por %p111, %p112
      %p115 = scmp.ne.s32.totalorder %s100, %s114
      %p116 = scmp.eq.s32.totalorder %s27, 0
      %p117 = por %p115, %p116
      %s119 = sadd.s32 %s118, 1
      %p122 = scmp.eq.s32.totalorder %s21, 1
      %p123 = scmp.ne.s32.totalorder %s118, %s120
      %p124 = scmp.eq.s32.totalorder %s21, 0
      %p125 = por %p123, %p124
      %p126 = scmp.ne.s32.totalorder %s118, %s120
      %p127 = scmp.eq.s32.totalorder %s26, 1
      %p128 = por %p126, %p127
      %p129 = scmp.ne.s32.totalorder %s120, %s121
      %p130 = scmp.eq.s32.totalorder %s26, 0
      %p131 = por %p129, %p130
      %p132 = scmp.ne.s32.totalorder %s120, %s121
      %p133 = scmp.eq.s32.totalorder %s27, 1
      %p134 = por %p132, %p133
      %p136 = scmp.ne.s32.totalorder %s121, %s135
      %p137 = scmp.eq.s32.totalorder %s27, 0
      %p138 = por %p136, %p137
      %s140 = sadd.s32 %s139, 1
      %p143 = scmp.eq.s32.totalorder %s21, 1
      %p144 = scmp.ne.s32.totalorder %s139, %s141
      %p145 = scmp.eq.s32.totalorder %s21, 0
      %p146 = por %p144, %p145
      %p147 = scmp.ne.s32.totalorder %s139, %s141
      %p148 = scmp.eq.s32.totalorder %s26, 1
      %p149 = por %p147, %p148
      %p150 = scmp.ne.s32.totalorder %s141, %s142
      %p151 = scmp.eq.s32.totalorder %s26, 0
      %p152 = por %p150, %p151
      %p153 = scmp.ne.s32.totalorder %s141, %s142
      %p154 = scmp.eq.s32.totalorder %s27, 1
      %p155 = por %p153, %p154
      %p157 = scmp.ne.s32.totalorder %s142, %s156
      %p158 = scmp.eq.s32.totalorder %s27, 0
      %p159 = por %p157, %p158
      %s160 = ssub.s32 %s21, %s28
      %p161 = scmp.eq.s32.totalorder %s160, 0
      %s163 = sadd.s32 %s162, 1
      %s164 = scalar_select %p161, %s162, %s163
      %p167 = pneg %p161
      %p168 = scmp.eq.s32.totalorder %s21, 1
      %p169 = por %p167, %p168
      %p170 = scmp.ne.s32.totalorder %s162, %s165
      %p171 = scmp.eq.s32.totalorder %s21, 0
      %p172 = por %p170, %p171
      %p173 = scmp.ne.s32.totalorder %s162, %s165
      %p174 = scmp.eq.s32.totalorder %s26, 1
      %p175 = por %p173, %p174
      %p176 = scmp.ne.s32.totalorder %s165, %s166
      %p177 = scmp.eq.s32.totalorder %s26, 0
      %p178 = por %p176, %p177
      %p179 = scmp.ne.s32.totalorder %s165, %s166
      %p180 = scmp.eq.s32.totalorder %s27, 1
      %p181 = por %p179, %p180
      %p183 = scmp.ne.s32.totalorder %s166, %s182
      %p184 = scmp.eq.s32.totalorder %s27, 0
      %p185 = por %p183, %p184
      %p186 = scmp.le.s32.totalorder 1, %s21
      %p187 = scmp.lt.s32.totalorder %s21, 3
      %p188 = pnand %p186, %p187
      %p189 = pneg %p188
      // Predicated region
      $region9: #{tpu_custom_call.1} parent=5 // pred_check
        _
      $region10: #{tpu_custom_call.1} parent=5 // pred_check_branch
        %191 = sbr.rel (%p188) target = $region12
      $region11: #{tpu_custom_call.1} parent=5 // pred_region
        %s192 = ssub.s32 %s21, 1
        // Predicated region
        $region13: #{tpu_custom_call.1} parent=11 // pred_check
          %p193 = pneg %p68
        $region14: #{tpu_custom_call.1} parent=11 // pred_check_branch
          %195 = sbr.rel (%p193) target = $region16
        $region15: #{tpu_custom_call.1} parent=11 // pred_region
          %s197 = ssub.s32 32, 32
          %198 = vsyncadd [#allocation5], %s197
          %s200 = sshll.u32 %s1, 4
          %s201 = int_to_ptr.vmem [resolvable:$true] %s200
          %203 = dma.vmem_to_smem %s201, 32, [#allocation6], [#allocation5]
        $region16: #{tpu_custom_call.1} parent=11 // pred_fallthru
          _
        // Predicated region
        $region17: #{tpu_custom_call.1} parent=11 // pred_check
          %p204 = pneg %p89
        $region18: #{tpu_custom_call.1} parent=11 // pred_check_branch
          %206 = sbr.rel (%p204) target = $region20
        $region19: #{tpu_custom_call.1} parent=11 // pred_region
          %s208 = ssub.s32 32, 32
          %209 = vsyncadd [#allocation8], %s208
          %s211 = sshll.u32 %s2, 4
          %s212 = int_to_ptr.vmem [resolvable:$true] %s211
          %214 = dma.vmem_to_smem %s212, 32, [#allocation7], [#allocation8]
        $region20: #{tpu_custom_call.1} parent=11 // pred_fallthru
          _
        // Predicated region
        $region21: #{tpu_custom_call.1} parent=11 // pred_check
          %p215 = pneg %p110
        $region22: #{tpu_custom_call.1} parent=11 // pred_check_branch
          %217 = sbr.rel (%p215) target = $region24
        $region23: #{tpu_custom_call.1} parent=11 // pred_region
          %s219 = ssub.s32 32, 32
          %220 = vsyncadd [#allocation8], %s219
          %s222 = sshll.u32 %s3, 4
          %s223 = int_to_ptr.vmem [resolvable:$true] %s222
          %225 = dma.vmem_to_smem %s223, 32, [#allocation9], [#allocation8]
        $region24: #{tpu_custom_call.1} parent=11 // pred_fallthru
          _
        // Predicated region
        $region25: #{tpu_custom_call.1} parent=11 // pred_check
          %p226 = pneg %p131
        $region26: #{tpu_custom_call.1} parent=11 // pred_check_branch
          %228 = sbr.rel (%p226) target = $region28
        $region27: #{tpu_custom_call.1} parent=11 // pred_region
          %s230 = ssub.s32 32, 32
          %231 = vsyncadd [#allocation11], %s230
          %s233 = sshll.u32 %s4, 4
          %s234 = int_to_ptr.vmem [resolvable:$true] %s233
          %236 = dma.vmem_to_smem %s234, 32, [#allocation10], [#allocation11]
        $region28: #{tpu_custom_call.1} parent=11 // pred_fallthru
          _
        // Predicated region
        $region29: #{tpu_custom_call.1} parent=11 // pred_check
          %p237 = pneg %p152
        $region30: #{tpu_custom_call.1} parent=11 // pred_check_branch
          %239 = sbr.rel (%p237) target = $region32
        $region31: #{tpu_custom_call.1} parent=11 // pred_region
          %s241 = ssub.s32 32, 32
          %242 = vsyncadd [#allocation11], %s241
          %s244 = sshll.u32 %s5, 4
          %s245 = int_to_ptr.vmem [resolvable:$true] %s244
          %247 = dma.vmem_to_smem %s245, 32, [#allocation12], [#allocation11]
        $region32: #{tpu_custom_call.1} parent=11 // pred_fallthru
          _
      $region12: #{tpu_custom_call.1} parent=5 // pred_fallthru
        _
      %p248 = scmp.lt.s32.totalorder %s21, 2
      // Predicated region
      $region33: #{tpu_custom_call.1} parent=5 // pred_check
        %p249 = pneg %p248
      $region34: #{tpu_custom_call.1} parent=5 // pred_check_branch
        %251 = sbr.rel (%p249) target = $region36
      $region35: #{tpu_custom_call.1} parent=5 // pred_region
        // Predicated region
        $region37: #{tpu_custom_call.1} parent=35 // pred_check
          %p252 = pneg %p41
        $region38: #{tpu_custom_call.1} parent=35 // pred_check_branch
          %254 = sbr.rel (%p252) target = $region40
        $region39: #{tpu_custom_call.1} parent=35 // pred_region
          %s255 = sand.u32 %s31, 1
          %s256 = scalar_lea.sflag [#allocation3], %s255
          %s257 = sand.u32 %s31, 1
          %s258 = smul.addr %s257, 32
          %s259 = scalar_lea.vmem [#allocation2], %s258
          %s261 = ssub.s32 512, 512
          %262 = vsyncadd %s256, %s261
          %s263 = smul.addr %s21, 128
          %s264 = scalar_lea.hbm %s0, %s263
          %s265 = sshll.u32 %s259, 4
          %s266 = int_to_ptr.vmem [resolvable:$true] %s265
          %271 = dma.hbm_to_vmem [thread:$0]  %s264, 512, %s266, %s256, 256, 128, 8
        $region40: #{tpu_custom_call.1} parent=35 // pred_fallthru
          _
      $region36: #{tpu_custom_call.1} parent=5 // pred_fallthru
        _
      %p272 = scmp.le.s32.totalorder 1, %s21
      %p273 = scmp.lt.s32.totalorder %s21, 3
      %p274 = pnand %p272, %p273
      %p275 = pneg %p274
      // Predicated region
      $region41: #{tpu_custom_call.1} parent=5 // pred_check
        _
      $region42: #{tpu_custom_call.1} parent=5 // pred_check_branch
        %277 = sbr.rel (%p274) target = $region44
      $region43: #{tpu_custom_call.1} parent=5 // pred_region
        %s278 = ssub.s32 %s21, 1
        %s279 = sand.u32 %s34, 1
        %s280 = scalar_lea.sflag [#allocation3], %s279
        %s281 = sand.u32 %s34, 1
        %s282 = smul.addr %s281, 32
        %s283 = scalar_lea.vmem [#allocation2], %s282
        // Predicated region
        $region45: #{tpu_custom_call.1} parent=43 // pred_check
          %p284 = pneg %p47
        $region46: #{tpu_custom_call.1} parent=43 // pred_check_branch
          %286 = sbr.rel (%p284) target = $region48
        $region47: #{tpu_custom_call.1} parent=43 // pred_region
          %287 = dma.done %s280, 512
        $region48: #{tpu_custom_call.1} parent=43 // pred_fallthru
          _
        // Predicated region
        $region49: #{tpu_custom_call.1} parent=43 // pred_check
          %p288 = pneg %p68
        $region50: #{tpu_custom_call.1} parent=43 // pred_check_branch
          %290 = sbr.rel (%p288) target = $region52
        $region51: #{tpu_custom_call.1} parent=43 // pred_region
          %291 = dma.done [#allocation5], 32
        $region52: #{tpu_custom_call.1} parent=43 // pred_fallthru
          _
        // Predicated region
        $region53: #{tpu_custom_call.1} parent=43 // pred_check
          %p292 = pneg %p89
        $region54: #{tpu_custom_call.1} parent=43 // pred_check_branch
          %294 = sbr.rel (%p292) target = $region56
        $region55: #{tpu_custom_call.1} parent=43 // pred_region
          %295 = dma.done [#allocation8], 32
        $region56: #{tpu_custom_call.1} parent=43 // pred_fallthru
          _
        // Predicated region
        $region57: #{tpu_custom_call.1} parent=43 // pred_check
          %p296 = pneg %p110
        $region58: #{tpu_custom_call.1} parent=43 // pred_check_branch
          %298 = sbr.rel (%p296) target = $region60
        $region59: #{tpu_custom_call.1} parent=43 // pred_region
          %299 = dma.done [#allocation8], 32
        $region60: #{tpu_custom_call.1} parent=43 // pred_fallthru
          _
        // Predicated region
        $region61: #{tpu_custom_call.1} parent=43 // pred_check
          %p300 = pneg %p131
        $region62: #{tpu_custom_call.1} parent=43 // pred_check_branch
          %302 = sbr.rel (%p300) target = $region64
        $region63: #{tpu_custom_call.1} parent=43 // pred_region
          %303 = dma.done [#allocation11], 32
        $region64: #{tpu_custom_call.1} parent=43 // pred_fallthru
          _
        // Predicated region
        $region65: #{tpu_custom_call.1} parent=43 // pred_check
          %p304 = pneg %p152
        $region66: #{tpu_custom_call.1} parent=43 // pred_check_branch
          %306 = sbr.rel (%p304) target = $region68
        $region67: #{tpu_custom_call.1} parent=43 // pred_region
          %307 = dma.done [#allocation11], 32
        $region68: #{tpu_custom_call.1} parent=43 // pred_fallthru
          _
        %308 = sfence
        %s309 = sand.u32 %s34, 1
        %s310 = scalar_lea.sflag [#allocation3], %s309
        %s311 = sand.u32 %s34, 1
        %s312 = smul.addr %s311, 32
        %s313 = scalar_lea.vmem [#allocation2], %s312
        %p314 = pneg %p47
        %p315 = pneg %p44
        %p316 = pneg %p68
        %p317 = pneg %p65
        %p318 = pneg %p89
        %p319 = pneg %p86
        %p320 = pneg %p110
        %p321 = pneg %p107
        %p322 = pneg %p131
        %p323 = pneg %p128
        %p324 = pneg %p152
        %p325 = pneg %p149
        %p326 = pneg %p178
        %p327 = pneg %p175
        %s328 = sand.u32 %s165, 1
        %s329 = scalar_lea.sflag [#allocation4], %s328
        %s330 = sand.u32 %s165, 1
        %s331 = smul.addr %s330, 16
        %s332 = scalar_lea.vmem [#allocation13], %s331
        %v333 = vld [vmem:[%s283] sm:$0xff]
        %s334 = scalar_lea.vmem %s283, 8 [#allocation2]
        %v335 = vld [vmem:[%s334] sm:$0xff]
        %s336 = scalar_lea.vmem %s283, 16 [#allocation2]
        %v337 = vld [vmem:[%s336] sm:$0xff]
        %s338 = scalar_lea.vmem %s283, 24 [#allocation2]
        %v339 = vld [vmem:[%s338] sm:$0xff]
        %s340 = sld [smem:[#allocation6]]
        %s341 = sld [smem:[#allocation7]]
        %s342 = sld [smem:[#allocation9]]
        %s343 = sld [smem:[#allocation10]]
        %s344 = sld [smem:[#allocation12]]
        %v345 = vstv %s340
        %v346 = vsub.f32 %v333, %v345
        %v347 = vstv %s341
        %v348 = vsub.f32 %v335, %v347
        %v349 = vstv %s342
        %v350 = vsub.f32 %v349, %v333
        %v351 = vstv %s343
        %v352 = vsub.f32 %v351, %v335
        %v353 = vmin.f32 %v346, %v348
        %v354 = vmin.f32 %v350, %v352
        %v355 = vmin.f32 %v353, %v354
        %v356 = vmax.f32 %v346, %v348
        %v357 = vmax.f32 %v350, %v352
        %v358 = vmax.f32 %v356, %v357
        %s359 = ssub.f32 %s342, %s340
        %s360 = ssub.f32 %s343, %s341
        %s361 = smul.f32 %s359, %s360
        %vm362 = vcmp.gt.f32.partialorder %v355, 0.0
        %vm363 = vcmp.gt.f32.partialorder %v358, %v337
        %vm364 = vmand %vm362, %vm363
        %vm365 = vcmp.le.f32.partialorder %v358, %v339
        %vm366 = vmand %vm364, %vm365
        %v367 = vstv %s361
        %vm368 = vcmp.lt.f32.partialorder %v367, 1e+08
        %vm369 = vmand %vm366, %vm368
        %v370 = vsel %vm369, %v367, 1e+08
        %v371 = vstv %s344
        %v372 = vsel %vm369, %v371, 0
        %s373 = sld [smem:[#allocation6 + $0x1]]
        %s374 = sld [smem:[#allocation7 + $0x1]]
        %s375 = sld [smem:[#allocation9 + $0x1]]
        %s376 = sld [smem:[#allocation10 + $0x1]]
        %s377 = sld [smem:[#allocation12 + $0x1]]
        %v378 = vstv %s373
        %v379 = vsub.f32 %v333, %v378
        %v380 = vstv %s374
        %v381 = vsub.f32 %v335, %v380
        %v382 = vstv %s375
        %v383 = vsub.f32 %v382, %v333
        %v384 = vstv %s376
        %v385 = vsub.f32 %v384, %v335
        %v386 = vmin.f32 %v379, %v381
        %v387 = vmin.f32 %v383, %v385
        %v388 = vmin.f32 %v386, %v387
        %v389 = vmax.f32 %v379, %v381
        %v390 = vmax.f32 %v383, %v385
        %v391 = vmax.f32 %v389, %v390
        %s392 = ssub.f32 %s375, %s373
        %s393 = ssub.f32 %s376, %s374
        %s394 = smul.f32 %s392, %s393
        %vm395 = vcmp.gt.f32.partialorder %v388, 0.0
        %vm396 = vcmp.gt.f32.partialorder %v391, %v337
        %vm397 = vmand %vm395, %vm396
        %vm398 = vcmp.le.f32.partialorder %v391, %v339
        %vm399 = vmand %vm397, %vm398
        %v400 = vstv %s394
        %vm401 = vcmp.lt.f32.partialorder %v400, %v370
        %vm402 = vmand %vm399, %vm401
        %v403 = vsel %vm402, %v400, %v370
        %v404 = vstv %s377
        %v405 = vsel %vm402, %v404, %v372
        %vm406 = vmor %vm366, %vm399
        %s407 = sld [smem:[#allocation6 + $0x2]]
        %s408 = sld [smem:[#allocation7 + $0x2]]
        %s409 = sld [smem:[#allocation9 + $0x2]]
        %s410 = sld [smem:[#allocation10 + $0x2]]
        %s411 = sld [smem:[#allocation12 + $0x2]]
        %v412 = vstv %s407
        %v413 = vsub.f32 %v333, %v412
        %v414 = vstv %s408
        %v415 = vsub.f32 %v335, %v414
        %v416 = vstv %s409
        %v417 = vsub.f32 %v416, %v333
        %v418 = vstv %s410
        %v419 = vsub.f32 %v418, %v335
        %v420 = vmin.f32 %v413, %v415
        %v421 = vmin.f32 %v417, %v419
        %v422 = vmin.f32 %v420, %v421
        %v423 = vmax.f32 %v413, %v415
        %v424 = vmax.f32 %v417, %v419
        %v425 = vmax.f32 %v423, %v424
        %s426 = ssub.f32 %s409, %s407
        %s427 = ssub.f32 %s410, %s408
        %s428 = smul.f32 %s426, %s427
        %vm429 = vcmp.gt.f32.partialorder %v422, 0.0
        %vm430 = vcmp.gt.f32.partialorder %v425, %v337
        %vm431 = vmand %vm429, %vm430
        %vm432 = vcmp.le.f32.partialorder %v425, %v339
        %vm433 = vmand %vm431, %vm432
        %v434 = vstv %s428
        %vm435 = vcmp.lt.f32.partialorder %v434, %v403
        %vm436 = vmand %vm433, %vm435
        %v437 = vsel %vm436, %v434, %v403
        %v438 = vstv %s411
        %v439 = vsel %vm436, %v438, %v405
        %vm440 = vmor %vm406, %vm433
        %s441 = sld [smem:[#allocation6 + $0x3]]
        %s442 = sld [smem:[#allocation7 + $0x3]]
        %s443 = sld [smem:[#allocation9 + $0x3]]
        %s444 = sld [smem:[#allocation10 + $0x3]]
        %s445 = sld [smem:[#allocation12 + $0x3]]
        %v446 = vstv %s441
        %v447 = vsub.f32 %v333, %v446
        %v448 = vstv %s442
        %v449 = vsub.f32 %v335, %v448
        %v450 = vstv %s443
        %v451 = vsub.f32 %v450, %v333
        %v452 = vstv %s444
        %v453 = vsub.f32 %v452, %v335
        %v454 = vmin.f32 %v447, %v449
        %v455 = vmin.f32 %v451, %v453
        %v456 = vmin.f32 %v454, %v455
        %v457 = vmax.f32 %v447, %v449
        %v458 = vmax.f32 %v451, %v453
        %v459 = vmax.f32 %v457, %v458
        %s460 = ssub.f32 %s443, %s441
        %s461 = ssub.f32 %s444, %s442
        %s462 = smul.f32 %s460, %s461
        %vm463 = vcmp.gt.f32.partialorder %v456, 0.0
        %vm464 = vcmp.gt.f32.partialorder %v459, %v337
        %vm465 = vmand %vm463, %vm464
        %vm466 = vcmp.le.f32.partialorder %v459, %v339
        %vm467 = vmand %vm465, %vm466
        %v468 = vstv %s462
        %vm469 = vcmp.lt.f32.partialorder %v468, %v437
        %vm470 = vmand %vm467, %vm469
        %v471 = vsel %vm470, %v468, %v437
        %v472 = vstv %s445
        %v473 = vsel %vm470, %v472, %v439
        %vm474 = vmor %vm440, %vm467
        %s475 = sld [smem:[#allocation6 + $0x4]]
        %s476 = sld [smem:[#allocation7 + $0x4]]
        %s477 = sld [smem:[#allocation9 + $0x4]]
        %s478 = sld [smem:[#allocation10 + $0x4]]
        %s479 = sld [smem:[#allocation12 + $0x4]]
        %v480 = vstv %s475
        %v481 = vsub.f32 %v333, %v480
        %v482 = vstv %s476
        %v483 = vsub.f32 %v335, %v482
        %v484 = vstv %s477
        %v485 = vsub.f32 %v484, %v333
        %v486 = vstv %s478
        %v487 = vsub.f32 %v486, %v335
        %v488 = vmin.f32 %v481, %v483
        %v489 = vmin.f32 %v485, %v487
        %v490 = vmin.f32 %v488, %v489
        %v491 = vmax.f32 %v481, %v483
        %v492 = vmax.f32 %v485, %v487
        %v493 = vmax.f32 %v491, %v492
        %s494 = ssub.f32 %s477, %s475
        %s495 = ssub.f32 %s478, %s476
        %s496 = smul.f32 %s494, %s495
        %vm497 = vcmp.gt.f32.partialorder %v490, 0.0
        %vm498 = vcmp.gt.f32.partialorder %v493, %v337
        %vm499 = vmand %vm497, %vm498
        %vm500 = vcmp.le.f32.partialorder %v493, %v339
        %vm501 = vmand %vm499, %vm500
        %v502 = vstv %s496
        %vm503 = vcmp.lt.f32.partialorder %v502, %v471
        %vm504 = vmand %vm501, %vm503
        %v505 = vsel %vm504, %v502, %v471
        %v506 = vstv %s479
        %v507 = vsel %vm504, %v506, %v473
        %vm508 = vmor %vm474, %vm501
        %s509 = sld [smem:[#allocation6 + $0x5]]
        %s510 = sld [smem:[#allocation7 + $0x5]]
        %s511 = sld [smem:[#allocation9 + $0x5]]
        %s512 = sld [smem:[#allocation10 + $0x5]]
        %s513 = sld [smem:[#allocation12 + $0x5]]
        %v514 = vstv %s509
        %v515 = vsub.f32 %v333, %v514
        %v516 = vstv %s510
        %v517 = vsub.f32 %v335, %v516
        %v518 = vstv %s511
        %v519 = vsub.f32 %v518, %v333
        %v520 = vstv %s512
        %v521 = vsub.f32 %v520, %v335
        %v522 = vmin.f32 %v515, %v517
        %v523 = vmin.f32 %v519, %v521
        %v524 = vmin.f32 %v522, %v523
        %v525 = vmax.f32 %v515, %v517
        %v526 = vmax.f32 %v519, %v521
        %v527 = vmax.f32 %v525, %v526
        %s528 = ssub.f32 %s511, %s509
        %s529 = ssub.f32 %s512, %s510
        %s530 = smul.f32 %s528, %s529
        %vm531 = vcmp.gt.f32.partialorder %v524, 0.0
        %vm532 = vcmp.gt.f32.partialorder %v527, %v337
        %vm533 = vmand %vm531, %vm532
        %vm534 = vcmp.le.f32.partialorder %v527, %v339
        %vm535 = vmand %vm533, %vm534
        %v536 = vstv %s530
        %vm537 = vcmp.lt.f32.partialorder %v536, %v505
        %vm538 = vmand %vm535, %vm537
        %v539 = vsel %vm538, %v536, %v505
        %v540 = vstv %s513
        %v541 = vsel %vm538, %v540, %v507
        %vm542 = vmor %vm508, %vm535
        %s543 = sld [smem:[#allocation6 + $0x6]]
        %s544 = sld [smem:[#allocation7 + $0x6]]
        %s545 = sld [smem:[#allocation9 + $0x6]]
        %s546 = sld [smem:[#allocation10 + $0x6]]
        %s547 = sld [smem:[#allocation12 + $0x6]]
        %v548 = vstv %s543
        %v549 = vsub.f32 %v333, %v548
        %v550 = vstv %s544
        %v551 = vsub.f32 %v335, %v550
        %v552 = vstv %s545
        %v553 = vsub.f32 %v552, %v333
        %v554 = vstv %s546
        %v555 = vsub.f32 %v554, %v335
        %v556 = vmin.f32 %v549, %v551
        %v557 = vmin.f32 %v553, %v555
        %v558 = vmin.f32 %v556, %v557
        %v559 = vmax.f32 %v549, %v551
        %v560 = vmax.f32 %v553, %v555
        %v561 = vmax.f32 %v559, %v560
        %s562 = ssub.f32 %s545, %s543
        %s563 = ssub.f32 %s546, %s544
        %s564 = smul.f32 %s562, %s563
        %vm565 = vcmp.gt.f32.partialorder %v558, 0.0
        %vm566 = vcmp.gt.f32.partialorder %v561, %v337
        %vm567 = vmand %vm565, %vm566
        %vm568 = vcmp.le.f32.partialorder %v561, %v339
        %vm569 = vmand %vm567, %vm568
        %v570 = vstv %s564
        %vm571 = vcmp.lt.f32.partialorder %v570, %v539
        %vm572 = vmand %vm569, %vm571
        %v573 = vsel %vm572, %v570, %v539
        %v574 = vstv %s547
        %v575 = vsel %vm572, %v574, %v541
        %vm576 = vmor %vm542, %vm569
        %s577 = sld [smem:[#allocation6 + $0x7]]
        %s578 = sld [smem:[#allocation7 + $0x7]]
        %s579 = sld [smem:[#allocation9 + $0x7]]
        %s580 = sld [smem:[#allocation10 + $0x7]]
        %s581 = sld [smem:[#allocation12 + $0x7]]
        %v582 = vstv %s577
        %v583 = vsub.f32 %v333, %v582
        %v584 = vstv %s578
        %v585 = vsub.f32 %v335, %v584
        %v586 = vstv %s579
        %v587 = vsub.f32 %v586, %v333
        %v588 = vstv %s580
        %v589 = vsub.f32 %v588, %v335
        %v590 = vmin.f32 %v583, %v585
        %v591 = vmin.f32 %v587, %v589
        %v592 = vmin.f32 %v590, %v591
        %v593 = vmax.f32 %v583, %v585
        %v594 = vmax.f32 %v587, %v589
        %v595 = vmax.f32 %v593, %v594
        %s596 = ssub.f32 %s579, %s577
        %s597 = ssub.f32 %s580, %s578
        %s598 = smul.f32 %s596, %s597
        %vm599 = vcmp.gt.f32.partialorder %v592, 0.0
        %vm600 = vcmp.gt.f32.partialorder %v595, %v337
        %vm601 = vmand %vm599, %vm600
        %vm602 = vcmp.le.f32.partialorder %v595, %v339
        %vm603 = vmand %vm601, %vm602
        %v604 = vstv %s598
        %vm605 = vcmp.lt.f32.partialorder %v604, %v573
        %vm606 = vmand %vm603, %vm605
        %v607 = vstv %s581
        %v608 = vsel %vm606, %v607, %v575
        %vm609 = vmor %vm576, %vm603
        %v610 = vsel %vm609, %v608, 0
        %611 = vst [vmem:[%s332] sm:$0xff] %v610
        %s612 = sld [smem:[#allocation6 + $0x80]]
        %s613 = sld [smem:[#allocation7 + $0x80]]
        %s614 = sld [smem:[#allocation9 + $0x80]]
        %s615 = sld [smem:[#allocation10 + $0x80]]
        %s616 = sld [smem:[#allocation12 + $0x80]]
        %v617 = vstv %s612
        %v618 = vsub.f32 %v333, %v617
        %v619 = vstv %s613
        %v620 = vsub.f32 %v335, %v619
        %v621 = vstv %s614
        %v622 = vsub.f32 %v621, %v333
        %v623 = vstv %s615
        %v624 = vsub.f32 %v623, %v335
        %v625 = vmin.f32 %v618, %v620
        %v626 = vmin.f32 %v622, %v624
        %v627 = vmin.f32 %v625, %v626
        %v628 = vmax.f32 %v618, %v620
        %v629 = vmax.f32 %v622, %v624
        %v630 = vmax.f32 %v628, %v629
        %s631 = ssub.f32 %s614, %s612
        %s632 = ssub.f32 %s615, %s613
        %s633 = smul.f32 %s631, %s632
        %vm634 = vcmp.gt.f32.partialorder %v627, 0.0
        %vm635 = vcmp.gt.f32.partialorder %v630, %v337
        %vm636 = vmand %vm634, %vm635
        %vm637 = vcmp.le.f32.partialorder %v630, %v339
        %vm638 = vmand %vm636, %vm637
        %v639 = vstv %s633
        %vm640 = vcmp.lt.f32.partialorder %v639, 1e+08
        %vm641 = vmand %vm638, %vm640
        %v642 = vsel %vm641, %v639, 1e+08
        %v643 = vstv %s616
        %v644 = vsel %vm641, %v643, 0
        %s645 = sld [smem:[#allocation6 + $0x81]]
        %s646 = sld [smem:[#allocation7 + $0x81]]
        %s647 = sld [smem:[#allocation9 + $0x81]]
        %s648 = sld [smem:[#allocation10 + $0x81]]
        %s649 = sld [smem:[#allocation12 + $0x81]]
        %v650 = vstv %s645
        %v651 = vsub.f32 %v333, %v650
        %v652 = vstv %s646
        %v653 = vsub.f32 %v335, %v652
        %v654 = vstv %s647
        %v655 = vsub.f32 %v654, %v333
        %v656 = vstv %s648
        %v657 = vsub.f32 %v656, %v335
        %v658 = vmin.f32 %v651, %v653
        %v659 = vmin.f32 %v655, %v657
        %v660 = vmin.f32 %v658, %v659
        %v661 = vmax.f32 %v651, %v653
        %v662 = vmax.f32 %v655, %v657
        %v663 = vmax.f32 %v661, %v662
        %s664 = ssub.f32 %s647, %s645
        %s665 = ssub.f32 %s648, %s646
        %s666 = smul.f32 %s664, %s665
        %vm667 = vcmp.gt.f32.partialorder %v660, 0.0
        %vm668 = vcmp.gt.f32.partialorder %v663, %v337
        %vm669 = vmand %vm667, %vm668
        %vm670 = vcmp.le.f32.partialorder %v663, %v339
        %vm671 = vmand %vm669, %vm670
        %v672 = vstv %s666
        %vm673 = vcmp.lt.f32.partialorder %v672, %v642
        %vm674 = vmand %vm671, %vm673
        %v675 = vsel %vm674, %v672, %v642
        %v676 = vstv %s649
        %v677 = vsel %vm674, %v676, %v644
        %vm678 = vmor %vm638, %vm671
        %s679 = sld [smem:[#allocation6 + $0x82]]
        %s680 = sld [smem:[#allocation7 + $0x82]]
        %s681 = sld [smem:[#allocation9 + $0x82]]
        %s682 = sld [smem:[#allocation10 + $0x82]]
        %s683 = sld [smem:[#allocation12 + $0x82]]
        %v684 = vstv %s679
        %v685 = vsub.f32 %v333, %v684
        %v686 = vstv %s680
        %v687 = vsub.f32 %v335, %v686
        %v688 = vstv %s681
        %v689 = vsub.f32 %v688, %v333
        %v690 = vstv %s682
        %v691 = vsub.f32 %v690, %v335
        %v692 = vmin.f32 %v685, %v687
        %v693 = vmin.f32 %v689, %v691
        %v694 = vmin.f32 %v692, %v693
        %v695 = vmax.f32 %v685, %v687
        %v696 = vmax.f32 %v689, %v691
        %v697 = vmax.f32 %v695, %v696
        %s698 = ssub.f32 %s681, %s679
        %s699 = ssub.f32 %s682, %s680
        %s700 = smul.f32 %s698, %s699
        %vm701 = vcmp.gt.f32.partialorder %v694, 0.0
        %vm702 = vcmp.gt.f32.partialorder %v697, %v337
        %vm703 = vmand %vm701, %vm702
        %vm704 = vcmp.le.f32.partialorder %v697, %v339
        %vm705 = vmand %vm703, %vm704
        %v706 = vstv %s700
        %vm707 = vcmp.lt.f32.partialorder %v706, %v675
        %vm708 = vmand %vm705, %vm707
        %v709 = vsel %vm708, %v706, %v675
        %v710 = vstv %s683
        %v711 = vsel %vm708, %v710, %v677
        %vm712 = vmor %vm678, %vm705
        %s713 = sld [smem:[#allocation6 + $0x83]]
        %s714 = sld [smem:[#allocation7 + $0x83]]
        %s715 = sld [smem:[#allocation9 + $0x83]]
        %s716 = sld [smem:[#allocation10 + $0x83]]
        %s717 = sld [smem:[#allocation12 + $0x83]]
        %v718 = vstv %s713
        %v719 = vsub.f32 %v333, %v718
        %v720 = vstv %s714
        %v721 = vsub.f32 %v335, %v720
        %v722 = vstv %s715
        %v723 = vsub.f32 %v722, %v333
        %v724 = vstv %s716
        %v725 = vsub.f32 %v724, %v335
        %v726 = vmin.f32 %v719, %v721
        %v727 = vmin.f32 %v723, %v725
        %v728 = vmin.f32 %v726, %v727
        %v729 = vmax.f32 %v719, %v721
        %v730 = vmax.f32 %v723, %v725
        %v731 = vmax.f32 %v729, %v730
        %s732 = ssub.f32 %s715, %s713
        %s733 = ssub.f32 %s716, %s714
        %s734 = smul.f32 %s732, %s733
        %vm735 = vcmp.gt.f32.partialorder %v728, 0.0
        %vm736 = vcmp.gt.f32.partialorder %v731, %v337
        %vm737 = vmand %vm735, %vm736
        %vm738 = vcmp.le.f32.partialorder %v731, %v339
        %vm739 = vmand %vm737, %vm738
        %v740 = vstv %s734
        %vm741 = vcmp.lt.f32.partialorder %v740, %v709
        %vm742 = vmand %vm739, %vm741
        %v743 = vsel %vm742, %v740, %v709
        %v744 = vstv %s717
        %v745 = vsel %vm742, %v744, %v711
        %vm746 = vmor %vm712, %vm739
        %s747 = sld [smem:[#allocation6 + $0x84]]
        %s748 = sld [smem:[#allocation7 + $0x84]]
        %s749 = sld [smem:[#allocation9 + $0x84]]
        %s750 = sld [smem:[#allocation10 + $0x84]]
        %s751 = sld [smem:[#allocation12 + $0x84]]
        %v752 = vstv %s747
        %v753 = vsub.f32 %v333, %v752
        %v754 = vstv %s748
        %v755 = vsub.f32 %v335, %v754
        %v756 = vstv %s749
        %v757 = vsub.f32 %v756, %v333
        %v758 = vstv %s750
        %v759 = vsub.f32 %v758, %v335
        %v760 = vmin.f32 %v753, %v755
        %v761 = vmin.f32 %v757, %v759
        %v762 = vmin.f32 %v760, %v761
        %v763 = vmax.f32 %v753, %v755
        %v764 = vmax.f32 %v757, %v759
        %v765 = vmax.f32 %v763, %v764
        %s766 = ssub.f32 %s749, %s747
        %s767 = ssub.f32 %s750, %s748
        %s768 = smul.f32 %s766, %s767
        %vm769 = vcmp.gt.f32.partialorder %v762, 0.0
        %vm770 = vcmp.gt.f32.partialorder %v765, %v337
        %vm771 = vmand %vm769, %vm770
        %vm772 = vcmp.le.f32.partialorder %v765, %v339
        %vm773 = vmand %vm771, %vm772
        %v774 = vstv %s768
        %vm775 = vcmp.lt.f32.partialorder %v774, %v743
        %vm776 = vmand %vm773, %vm775
        %v777 = vsel %vm776, %v774, %v743
        %v778 = vstv %s751
        %v779 = vsel %vm776, %v778, %v745
        %vm780 = vmor %vm746, %vm773
        %s781 = sld [smem:[#allocation6 + $0x85]]
        %s782 = sld [smem:[#allocation7 + $0x85]]
        %s783 = sld [smem:[#allocation9 + $0x85]]
        %s784 = sld [smem:[#allocation10 + $0x85]]
        %s785 = sld [smem:[#allocation12 + $0x85]]
        %v786 = vstv %s781
        %v787 = vsub.f32 %v333, %v786
        %v788 = vstv %s782
        %v789 = vsub.f32 %v335, %v788
        %v790 = vstv %s783
        %v791 = vsub.f32 %v790, %v333
        %v792 = vstv %s784
        %v793 = vsub.f32 %v792, %v335
        %v794 = vmin.f32 %v787, %v789
        %v795 = vmin.f32 %v791, %v793
        %v796 = vmin.f32 %v794, %v795
        %v797 = vmax.f32 %v787, %v789
        %v798 = vmax.f32 %v791, %v793
        %v799 = vmax.f32 %v797, %v798
        %s800 = ssub.f32 %s783, %s781
        %s801 = ssub.f32 %s784, %s782
        %s802 = smul.f32 %s800, %s801
        %vm803 = vcmp.gt.f32.partialorder %v796, 0.0
        %vm804 = vcmp.gt.f32.partialorder %v799, %v337
        %vm805 = vmand %vm803, %vm804
        %vm806 = vcmp.le.f32.partialorder %v799, %v339
        %vm807 = vmand %vm805, %vm806
        %v808 = vstv %s802
        %vm809 = vcmp.lt.f32.partialorder %v808, %v777
        %vm810 = vmand %vm807, %vm809
        %v811 = vsel %vm810, %v808, %v777
        %v812 = vstv %s785
        %v813 = vsel %vm810, %v812, %v779
        %vm814 = vmor %vm780, %vm807
        %s815 = sld [smem:[#allocation6 + $0x86]]
        %s816 = sld [smem:[#allocation7 + $0x86]]
        %s817 = sld [smem:[#allocation9 + $0x86]]
        %s818 = sld [smem:[#allocation10 + $0x86]]
        %s819 = sld [smem:[#allocation12 + $0x86]]
        %v820 = vstv %s815
        %v821 = vsub.f32 %v333, %v820
        %v822 = vstv %s816
        %v823 = vsub.f32 %v335, %v822
        %v824 = vstv %s817
        %v825 = vsub.f32 %v824, %v333
        %v826 = vstv %s818
        %v827 = vsub.f32 %v826, %v335
        %v828 = vmin.f32 %v821, %v823
        %v829 = vmin.f32 %v825, %v827
        %v830 = vmin.f32 %v828, %v829
        %v831 = vmax.f32 %v821, %v823
        %v832 = vmax.f32 %v825, %v827
        %v833 = vmax.f32 %v831, %v832
        %s834 = ssub.f32 %s817, %s815
        %s835 = ssub.f32 %s818, %s816
        %s836 = smul.f32 %s834, %s835
        %vm837 = vcmp.gt.f32.partialorder %v830, 0.0
        %vm838 = vcmp.gt.f32.partialorder %v833, %v337
        %vm839 = vmand %vm837, %vm838
        %vm840 = vcmp.le.f32.partialorder %v833, %v339
        %vm841 = vmand %vm839, %vm840
        %v842 = vstv %s836
        %vm843 = vcmp.lt.f32.partialorder %v842, %v811
        %vm844 = vmand %vm841, %vm843
        %v845 = vsel %vm844, %v842, %v811
        %v846 = vstv %s819
        %v847 = vsel %vm844, %v846, %v813
        %vm848 = vmor %vm814, %vm841
        %s849 = sld [smem:[#allocation6 + $0x87]]
        %s850 = sld [smem:[#allocation7 + $0x87]]
        %s851 = sld [smem:[#allocation9 + $0x87]]
        %s852 = sld [smem:[#allocation10 + $0x87]]
        %s853 = sld [smem:[#allocation12 + $0x87]]
        %v854 = vstv %s849
        %v855 = vsub.f32 %v333, %v854
        %v856 = vstv %s850
        %v857 = vsub.f32 %v335, %v856
        %v858 = vstv %s851
        %v859 = vsub.f32 %v858, %v333
        %v860 = vstv %s852
        %v861 = vsub.f32 %v860, %v335
        %v862 = vmin.f32 %v855, %v857
        %v863 = vmin.f32 %v859, %v861
        %v864 = vmin.f32 %v862, %v863
        %v865 = vmax.f32 %v855, %v857
        %v866 = vmax.f32 %v859, %v861
        %v867 = vmax.f32 %v865, %v866
        %s868 = ssub.f32 %s851, %s849
        %s869 = ssub.f32 %s852, %s850
        %s870 = smul.f32 %s868, %s869
        %vm871 = vcmp.gt.f32.partialorder %v864, 0.0
        %vm872 = vcmp.gt.f32.partialorder %v867, %v337
        %vm873 = vmand %vm871, %vm872
        %vm874 = vcmp.le.f32.partialorder %v867, %v339
        %vm875 = vmand %vm873, %vm874
        %v876 = vstv %s870
        %vm877 = vcmp.lt.f32.partialorder %v876, %v845
        %vm878 = vmand %vm875, %vm877
        %v879 = vstv %s853
        %v880 = vsel %vm878, %v879, %v847
        %vm881 = vmor %vm848, %vm875
        %v882 = vsel %vm881, %v880, 0
        %s883 = scalar_lea.vmem %s332, 8 [#allocation13]
        %884 = vst [vmem:[%s883] sm:$0xff] %v882
        %s885 = sand.u32 %s165, 1
        %s886 = scalar_lea.sflag [#allocation4], %s885
        %s887 = sand.u32 %s165, 1
        %s888 = smul.addr %s887, 16
        %s889 = scalar_lea.vmem [#allocation13], %s888
        // Predicated region
        $region69: #{tpu_custom_call.1} parent=43 // pred_check
          %p890 = pneg %p175
        $region70: #{tpu_custom_call.1} parent=43 // pred_check_branch
          %892 = sbr.rel (%p890) target = $region72
        $region71: #{tpu_custom_call.1} parent=43 // pred_region
          %s894 = ssub.s32 256, 256
          %895 = vsyncadd %s886, %s894
          %s896 = smul.addr %s26, 128
          %s897 = scalar_lea.hbm %s6, %s896
          %s898 = sshll.u32 %s889, 4
          %s899 = int_to_ptr.vmem [resolvable:$true] %s898
          %904 = dma.vmem_to_hbm [thread:$0]  %s899, 256, %s897, %s886, 128, 256, 8
        $region72: #{tpu_custom_call.1} parent=43 // pred_fallthru
          _
      $region44: #{tpu_custom_call.1} parent=5 // pred_fallthru
        _
      %p905 = scmp.le.s32.totalorder 2, %s21
      // Predicated region
      $region73: #{tpu_custom_call.1} parent=5 // pred_check
        %p906 = pneg %p905
      $region74: #{tpu_custom_call.1} parent=5 // pred_check_branch
        %908 = sbr.rel (%p906) target = $region76
      $region75: #{tpu_custom_call.1} parent=5 // pred_region
        %s909 = ssub.s32 %s21, 2
        // Predicated region
        $region77: #{tpu_custom_call.1} parent=75 // pred_check
          %p910 = pneg %p181
        $region78: #{tpu_custom_call.1} parent=75 // pred_check_branch
          %912 = sbr.rel (%p910) target = $region80
        $region79: #{tpu_custom_call.1} parent=75 // pred_region
          %s913 = sand.u32 %s166, 1
          %s914 = scalar_lea.sflag [#allocation4], %s913
          %s915 = sand.u32 %s166, 1
          %s916 = smul.addr %s915, 16
          %s917 = scalar_lea.vmem [#allocation13], %s916
          %918 = dma.done %s914, 256
        $region80: #{tpu_custom_call.1} parent=75 // pred_fallthru
          _
      $region76: #{tpu_custom_call.1} parent=5 // pred_fallthru
        _
    $region6: #{tpu_custom_call.1} parent=1 // loop_footer
      %s25 = sadd.s32 1, %s21
    $region7: #{tpu_custom_call.1} parent=1 // loop_footer_branch
      %20 = sbr.rel target = $region3
    $region8: #{tpu_custom_call.1} parent=1 // loop_exit
      _
    %919 = vsyncpa [#allocation3], 1
    %s920 = scalar_lea.sflag [#allocation3], 1
    %921 = vsyncpa %s920, 1
    %922 = vsyncpa [#allocation4], 1
    %s923 = scalar_lea.sflag [#allocation4], 1
    %924 = vsyncpa %s923, 1
    %925 = vsyncpa [#allocation5], 1
    %s926 = scalar_lea.sflag [#allocation5], 1
    %927 = vsyncpa %s926, 1
    %928 = vsyncpa [#allocation8], 1
    %929 = vsyncpa [#allocation11], 1

</llo_original>
